<compile_context>
chip_gen: v5e
topology: v5e:2x2
jax: 0.10.0
libtpu: 0.0.40
codegen_flags: <defaults>
</compile_context>

<pallas_src>
import functools
import math

import jax
import jax.numpy as jnp
from jax import lax
from jax.experimental import pallas as pl
from jax.experimental.pallas import tpu as pltpu


def _round_up(x, m):
    return ((x + m - 1) // m) * m


def _sin_tok_input_emb_kernel(wid_ref, idx_ref, wtab_hbm, ctab_ref,
                              gamma_ref, beta_ref, out_ref,
                              gbuf, sem,
                              *, eps, scales, tm, lookahead):
    """One row-tile grid step.

    wid_ref   : (Mp,)     int32 SMEM  word ids for ALL rows (scalar prefetch)
    idx_ref   : (tm, 5)   int32 VMEM  [para, sent, tok, abs_pos, max_pos+type]
    wtab_hbm  : (V, H)    f32   HBM   word embedding table (manual DMA gather)
    ctab_ref  : (Pp, H)   bf16  VMEM  combined zero-padded [pe ; type] table
    gamma/beta: (1, H)    f32   VMEM  LayerNorm affine
    out_ref   : (tm, H)   f32   VMEM  output rows
    gbuf      : (tm, H)   f32   VMEM  gathered word-embedding rows
    sem       : (lookahead,) DMA semaphores
    """
    base = pl.program_id(0) * tm

    def start_row(r):
        wid = wid_ref[base + r]
        pltpu.make_async_copy(wtab_hbm.at[pl.ds(wid, 1), :],
                              gbuf.at[pl.ds(r, 1), :],
                              sem.at[r % lookahead]).start()

    # Fill the gather pipeline (static unroll; lookahead <= tm always).
    for r in range(lookahead):
        start_row(r)

    # While the row gather is in flight: fused struct + abs-pos + token-type
    # lookup as ONE multi-hot bf16 matmul on the MXU.
    idx = idx_ref[...]                                       # (tm, 5) int32
    P = ctab_ref.shape[0]
    iota_p = lax.broadcasted_iota(jnp.int32, (tm, P), 1)
    counts = jnp.zeros((tm, P), jnp.bfloat16)
    for k, s in enumerate(scales):
        hit = (iota_p == idx[:, k:k + 1]).astype(jnp.bfloat16)
        counts = counts + (hit if s == 1.0 else jnp.bfloat16(s) * hit)
    se = jnp.dot(counts, ctab_ref[...], preferred_element_type=jnp.float32)

    # Drain the gather pipeline: wait row r, start row r + lookahead.
    def drain(r, carry):
        pltpu.make_async_copy(wtab_hbm.at[pl.ds(0, 1), :],
                              gbuf.at[pl.ds(r, 1), :],
                              sem.at[r % lookahead]).wait()

        @pl.when(r + lookahead < tm)
        def _():
            start_row(r + lookahead)

        return carry

    lax.fori_loop(0, tm, drain, 0)

    x = gbuf[...] + se                                       # f32

    # BertLayerNorm over hidden dim (biased variance), f32; rsqrt -> EUP.
    mu = jnp.mean(x, axis=-1, keepdims=True)
    xc = x - mu
    var = jnp.mean(xc * xc, axis=-1, keepdims=True)
    y = xc * lax.rsqrt(var + eps)
    y = y * gamma_ref[0, :] + beta_ref[0, :]
    # TODO(synk): nn.Dropout omitted (eval-mode identity); training-mode dropout not implemented.
    out_ref[...] = y.astype(out_ref.dtype)


def sin_tok_input_emb(input_ids, token_type_ids, tok_struct_vec,
                      word_emb, type_emb, pe, gamma, beta,
                      *, eps=1e-12, comb_mode="sum",
                      row_tile=256, dma_lookahead=8):
    # TODO(synk): 'concat' comb mode (separate hidden/3 sinusoidal table) not implemented.
    assert comb_mode in ("sum", "mean")
    B, N = input_ids.shape
    V, H = word_emb.shape
    max_pos = pe.shape[0]
    n_types = type_emb.shape[0]
    assert N <= max_pos, "sequence length exceeds max_pos of the sinusoidal table"

    if token_type_ids is None:
        token_type_ids = jnp.zeros_like(input_ids)

    M = B * N
    tm = min(row_tile, _round_up(M, 8))
    if M > 8 and _round_up(M, tm) // tm < 2:
        # Keep at least 2 row tiles so megacore parts shard the row axis.
        tm = max(8, _round_up((M + 1) // 2, 8))
    Mp = _round_up(M, tm)
    num_r = Mp // tm
    lookahead = min(dma_lookahead, tm)

    # Word table stays in HBM in f32 (row DMAs stay word-aligned, no sub-word
    # packing); combined [pe ; type] table is bf16 and zero-padded so the MXU
    # contraction dim is a clean multiple of 256.
    wtab = word_emb.astype(jnp.float32)
    P = max_pos + n_types
    P_pad = _round_up(P, 256)
    ctab = jnp.concatenate([pe, type_emb], axis=0).astype(jnp.bfloat16)
    ctab = jnp.pad(ctab, ((0, P_pad - P), (0, 0)))

    wids = input_ids.reshape(M).astype(jnp.int32)
    struct = tok_struct_vec.reshape(M, 3).astype(jnp.int32)
    pos = jnp.tile(jnp.arange(N, dtype=jnp.int32), B).reshape(M, 1)
    tt = token_type_ids.reshape(M, 1).astype(jnp.int32) + max_pos
    idx = jnp.concatenate([struct, pos, tt], axis=1)          # (M, 5)
    if Mp != M:
        wids = jnp.pad(wids, (0, Mp - M))                     # id 0 stays in-bounds
        idx = jnp.pad(idx, ((0, Mp - M), (0, 0)))

    gamma2 = gamma.reshape(1, H).astype(jnp.float32)
    beta2 = beta.reshape(1, H).astype(jnp.float32)

    s = 1.0 if comb_mode == "sum" else 1.0 / 3.0
    scales = (s, s, s, 1.0, 1.0)   # para, sent, tok, abs-pos, token-type

    kernel = functools.partial(_sin_tok_input_emb_kernel, eps=float(eps),
                               scales=scales, tm=tm, lookahead=lookahead)

    grid_spec = pltpu.PrefetchScalarGridSpec(
        num_scalar_prefetch=1,
        grid=(num_r,),
        in_specs=[
            pl.BlockSpec((tm, 5), lambda r, wid: (r, 0)),      # struct/pos/type
            pl.BlockSpec(memory_space=pl.ANY),                 # word table (HBM)
            pl.BlockSpec((P_pad, H), lambda r, wid: (0, 0)),   # combined table
            pl.BlockSpec((1, H), lambda r, wid: (0, 0)),       # gamma
            pl.BlockSpec((1, H), lambda r, wid: (0, 0)),       # beta
        ],
        out_specs=pl.BlockSpec((tm, H), lambda r, wid: (r, 0)),
        scratch_shapes=[
            pltpu.VMEM((tm, H), jnp.float32),                  # gathered rows
            pltpu.SemaphoreType.DMA((lookahead,)),
        ],
    )

    # VMEM budget (generous; lane-padded where relevant).
    vmem_bytes = (
        2 * tm * 128 * 4            # idx tile (lane padded, double buffered)
        + 2 * P_pad * H * 2         # combined table
        + 4 * 128 * 4               # gamma / beta
        + 2 * tm * H * 4            # output tile (double buffered)
        + tm * H * 4                # gather scratch
        + tm * P_pad * (4 + 6 * 2)  # iota + multi-hot temporaries
        + 6 * tm * H * 4            # epilogue temporaries / headroom
    )
    try:
        phys_vmem = pltpu.get_tpu_info().vmem_capacity_bytes
    except Exception:
        phys_vmem = 128 << 20
    vmem_cap = (phys_vmem * 3) // 4            # leave Mosaic-internal headroom
    vmem_limit = int(min(max(vmem_bytes + (8 << 20), 32 << 20), vmem_cap))

    cost = pl.CostEstimate(
        flops=2 * Mp * P_pad * H,                  # multi-hot matmul only
        transcendentals=Mp,                        # rsqrt per row
        bytes_accessed=(Mp * H * 4                 # gathered word rows
                        + P_pad * H * 2            # combined table
                        + Mp * 6 * 4               # ids + struct/pos/type
                        + Mp * H * 4               # output
                        + 2 * H * 4),
    )

    out = pl.pallas_call(
        kernel,
        out_shape=jax.ShapeDtypeStruct((Mp, H), jnp.float32),
        grid_spec=grid_spec,
        compiler_params=pltpu.CompilerParams(
            dimension_semantics=("parallel",),
            vmem_limit_bytes=vmem_limit,
        ),
        cost_estimate=cost,
    )(wids, idx, wtab, ctab, gamma2, beta2)

    return out[:M].reshape(B, N, H)


if __name__ == "__main__":
    # Small shapes consistent with the module's forward.
    B, N, H = 2, 8, 32
    vocab_size, type_vocab_size, max_pos = 64, 2, 16
    eps = 1e-12

    key = jax.random.PRNGKey(0)
    k1, k2, k3, k4, k5 = jax.random.split(key, 5)

    # Deterministic parameter init (shapes per __init__).
    word_emb = 0.02 * jax.random.normal(k1, (vocab_size, H), jnp.float32)
    word_emb = word_emb.at[0].set(0.0)            # padding_idx=0
    type_emb = 0.02 * jax.random.normal(k2, (type_vocab_size, H), jnp.float32)

    # SinPositionalEncoding table (max_pos, H).
    position = jnp.arange(max_pos, dtype=jnp.float32)[:, None]
    div_term = jnp.exp(jnp.arange(0, H, 2, dtype=jnp.float32)
                       * -(math.log(10000.0) / H))
    pe = jnp.zeros((max_pos, H), jnp.float32)
    pe = pe.at[:, 0::2].set(jnp.sin(position * div_term))
    pe = pe.at[:, 1::2].set(jnp.cos(position * div_term))

    gamma = jnp.ones((1, H), jnp.float32)         # LayerNorm weight
    beta = jnp.zeros((1, H), jnp.float32)         # LayerNorm bias

    # Example inputs.
    input_ids = jax.random.randint(k3, (B, N), 0, vocab_size, jnp.int32)
    token_type_ids = jax.random.randint(k4, (B, N), 0, type_vocab_size, jnp.int32)
    tok_struct_vec = jax.random.randint(k5, (B, N, 3), 0, max_pos, jnp.int32)

    out = sin_tok_input_emb(input_ids, token_type_ids, tok_struct_vec,
                            word_emb, type_emb, pe, gamma, beta,
                            eps=eps, comb_mode="sum")
    out = jax.block_until_ready(out)

    # Pure-JAX reference.  pe / type tables are rounded to bf16 exactly as the
    # kernel consumes them; word embeddings are gathered at full f32 precision
    # (the kernel DMA-gathers f32 rows), so only f32 summation order differs.
    t_bf = type_emb.astype(jnp.bfloat16).astype(jnp.float32)
    pe_bf = pe.astype(jnp.bfloat16).astype(jnp.float32)
    words_ref = word_emb[input_ids]
    types_ref = t_bf[token_type_ids]
    pos_ref = jnp.broadcast_to(pe_bf[:N][None], (B, N, H))
    struct_ref = pe_bf[tok_struct_vec].sum(axis=2)
    x = words_ref + types_ref + pos_ref + struct_ref
    mu = x.mean(-1, keepdims=True)
    var = ((x - mu) ** 2).mean(-1, keepdims=True)
    ref = (x - mu) / jnp.sqrt(var + eps) * gamma[0] + beta[0]

    assert out.shape == (B, N, H) and out.dtype == jnp.float32
    err = float(jnp.max(jnp.abs(out - ref)))
    assert jnp.allclose(out, ref, atol=2e-3, rtol=2e-3), err
    print("KERNEL_OK")
</pallas_src>

<mosaic_0001>
module attributes {stable_mosaic.version = 11 : i64} {
  func.func @_sin_tok_input_emb_kernel(%arg0: i32, %arg1: memref<16xi32, #tpu.memory_space<smem>>, %arg2: memref<8x5xi32, #tpu.memory_space<vmem>>, %arg3: memref<64x32xf32, #tpu.memory_space<any>>, %arg4: memref<256x32xbf16, #tpu.memory_space<vmem>>, %arg5: memref<1x32xf32, #tpu.memory_space<vmem>>, %arg6: memref<1x32xf32, #tpu.memory_space<vmem>>, %arg7: memref<8x32xf32, #tpu.memory_space<vmem>>, %arg8: memref<8x32xf32, #tpu.memory_space<vmem>>, %arg9: memref<8x!tpu.dma_semaphore, #tpu.memory_space<semaphore_mem>>) attributes {dimension_semantics = [#tpu.dimension_semantics<parallel>], iteration_bounds = array<i64: 2>, scalar_prefetch = 1 : i64, scratch_operands = 2 : i64, tpu.core_type = #tpu.core_type<tc>, window_params = [{transform_indices = @transform_0, window_bounds = array<i64: 8, 5>}, {}, {pipeline_mode = #tpu.pipeline_mode<synchronous>, transform_indices = @transform_2, window_bounds = array<i64: 256, 32>}, {pipeline_mode = #tpu.pipeline_mode<synchronous>, transform_indices = @transform_3, window_bounds = array<i64: 1, 32>}, {pipeline_mode = #tpu.pipeline_mode<synchronous>, transform_indices = @transform_4, window_bounds = array<i64: 1, 32>}, {transform_indices = @transform_5, window_bounds = array<i64: 8, 32>}]} {
    %c8_i32 = arith.constant 8 : i32
    %0 = arith.muli %arg0, %c8_i32 : i32
    %c0_i32 = arith.constant 0 : i32
    %1 = arith.addi %0, %c0_i32 : i32
    %2 = arith.index_cast %1 : i32 to index
    %3 = memref.load %arg1[%2] : memref<16xi32, #tpu.memory_space<smem>>
    %c0_i32_0 = arith.constant 0 : i32
    %c0_i32_1 = arith.constant 0 : i32
    %4 = tpu.memref_slice %arg3[%3, %c0_i32_1] : memref<64x32xf32, #tpu.memory_space<any>> -> memref<1x32xf32, #tpu.memory_space<any>>
    %c0_i32_2 = arith.constant 0 : i32
    %c0_i32_3 = arith.constant 0 : i32
    %5 = tpu.memref_slice %arg8[%c0_i32_2, %c0_i32_3] : memref<8x32xf32, #tpu.memory_space<vmem>> -> memref<1x32xf32, #tpu.memory_space<vmem>>
    %6 = tpu.memref_slice %arg9[%c0_i32_0] : memref<8x!tpu.dma_semaphore, #tpu.memory_space<semaphore_mem>> -> memref<1x!tpu.dma_semaphore, #tpu.memory_space<semaphore_mem>>
    %7 = tpu.memref_squeeze %6 : memref<1x!tpu.dma_semaphore, #tpu.memory_space<semaphore_mem>> -> memref<!tpu.dma_semaphore, #tpu.memory_space<semaphore_mem>>
    tpu.enqueue_dma source(%4 : memref<1x32xf32, #tpu.memory_space<any>>) target(%5 : memref<1x32xf32, #tpu.memory_space<vmem>>) target_semaphore(%7 : memref<!tpu.dma_semaphore, #tpu.memory_space<semaphore_mem>>)
    %c1_i32 = arith.constant 1 : i32
    %8 = arith.addi %0, %c1_i32 : i32
    %9 = arith.index_cast %8 : i32 to index
    %10 = memref.load %arg1[%9] : memref<16xi32, #tpu.memory_space<smem>>
    %c1_i32_4 = arith.constant 1 : i32
    %c0_i32_5 = arith.constant 0 : i32
    %11 = tpu.memref_slice %arg3[%10, %c0_i32_5] : memref<64x32xf32, #tpu.memory_space<any>> -> memref<1x32xf32, #tpu.memory_space<any>>
    %c1_i32_6 = arith.constant 1 : i32
    %c0_i32_7 = arith.constant 0 : i32
    %12 = tpu.memref_slice %arg8[%c1_i32_6, %c0_i32_7] : memref<8x32xf32, #tpu.memory_space<vmem>> -> memref<1x32xf32, #tpu.memory_space<vmem>>
    %13 = tpu.memref_slice %arg9[%c1_i32_4] : memref<8x!tpu.dma_semaphore, #tpu.memory_space<semaphore_mem>> -> memref<1x!tpu.dma_semaphore, #tpu.memory_space<semaphore_mem>>
    %14 = tpu.memref_squeeze %13 : memref<1x!tpu.dma_semaphore, #tpu.memory_space<semaphore_mem>> -> memref<!tpu.dma_semaphore, #tpu.memory_space<semaphore_mem>>
    tpu.enqueue_dma source(%11 : memref<1x32xf32, #tpu.memory_space<any>>) target(%12 : memref<1x32xf32, #tpu.memory_space<vmem>>) target_semaphore(%14 : memref<!tpu.dma_semaphore, #tpu.memory_space<semaphore_mem>>)
    %c2_i32 = arith.constant 2 : i32
    %15 = arith.addi %0, %c2_i32 : i32
    %16 = arith.index_cast %15 : i32 to index
    %17 = memref.load %arg1[%16] : memref<16xi32, #tpu.memory_space<smem>>
    %c2_i32_8 = arith.constant 2 : i32
    %c0_i32_9 = arith.constant 0 : i32
    %18 = tpu.memref_slice %arg3[%17, %c0_i32_9] : memref<64x32xf32, #tpu.memory_space<any>> -> memref<1x32xf32, #tpu.memory_space<any>>
    %c2_i32_10 = arith.constant 2 : i32
    %c0_i32_11 = arith.constant 0 : i32
    %19 = tpu.memref_slice %arg8[%c2_i32_10, %c0_i32_11] : memref<8x32xf32, #tpu.memory_space<vmem>> -> memref<1x32xf32, #tpu.memory_space<vmem>>
    %20 = tpu.memref_slice %arg9[%c2_i32_8] : memref<8x!tpu.dma_semaphore, #tpu.memory_space<semaphore_mem>> -> memref<1x!tpu.dma_semaphore, #tpu.memory_space<semaphore_mem>>
    %21 = tpu.memref_squeeze %20 : memref<1x!tpu.dma_semaphore, #tpu.memory_space<semaphore_mem>> -> memref<!tpu.dma_semaphore, #tpu.memory_space<semaphore_mem>>
    tpu.enqueue_dma source(%18 : memref<1x32xf32, #tpu.memory_space<any>>) target(%19 : memref<1x32xf32, #tpu.memory_space<vmem>>) target_semaphore(%21 : memref<!tpu.dma_semaphore, #tpu.memory_space<semaphore_mem>>)
    %c3_i32 = arith.constant 3 : i32
    %22 = arith.addi %0, %c3_i32 : i32
    %23 = arith.index_cast %22 : i32 to index
    %24 = memref.load %arg1[%23] : memref<16xi32, #tpu.memory_space<smem>>
    %c3_i32_12 = arith.constant 3 : i32
    %c0_i32_13 = arith.constant 0 : i32
    %25 = tpu.memref_slice %arg3[%24, %c0_i32_13] : memref<64x32xf32, #tpu.memory_space<any>> -> memref<1x32xf32, #tpu.memory_space<any>>
    %c3_i32_14 = arith.constant 3 : i32
    %c0_i32_15 = arith.constant 0 : i32
    %26 = tpu.memref_slice %arg8[%c3_i32_14, %c0_i32_15] : memref<8x32xf32, #tpu.memory_space<vmem>> -> memref<1x32xf32, #tpu.memory_space<vmem>>
    %27 = tpu.memref_slice %arg9[%c3_i32_12] : memref<8x!tpu.dma_semaphore, #tpu.memory_space<semaphore_mem>> -> memref<1x!tpu.dma_semaphore, #tpu.memory_space<semaphore_mem>>
    %28 = tpu.memref_squeeze %27 : memref<1x!tpu.dma_semaphore, #tpu.memory_space<semaphore_mem>> -> memref<!tpu.dma_semaphore, #tpu.memory_space<semaphore_mem>>
    tpu.enqueue_dma source(%25 : memref<1x32xf32, #tpu.memory_space<any>>) target(%26 : memref<1x32xf32, #tpu.memory_space<vmem>>) target_semaphore(%28 : memref<!tpu.dma_semaphore, #tpu.memory_space<semaphore_mem>>)
    %c4_i32 = arith.constant 4 : i32
    %29 = arith.addi %0, %c4_i32 : i32
    %30 = arith.index_cast %29 : i32 to index
    %31 = memref.load %arg1[%30] : memref<16xi32, #tpu.memory_space<smem>>
    %c4_i32_16 = arith.constant 4 : i32
    %c0_i32_17 = arith.constant 0 : i32
    %32 = tpu.memref_slice %arg3[%31, %c0_i32_17] : memref<64x32xf32, #tpu.memory_space<any>> -> memref<1x32xf32, #tpu.memory_space<any>>
    %c4_i32_18 = arith.constant 4 : i32
    %c0_i32_19 = arith.constant 0 : i32
    %33 = tpu.memref_slice %arg8[%c4_i32_18, %c0_i32_19] : memref<8x32xf32, #tpu.memory_space<vmem>> -> memref<1x32xf32, #tpu.memory_space<vmem>>
    %34 = tpu.memref_slice %arg9[%c4_i32_16] : memref<8x!tpu.dma_semaphore, #tpu.memory_space<semaphore_mem>> -> memref<1x!tpu.dma_semaphore, #tpu.memory_space<semaphore_mem>>
    %35 = tpu.memref_squeeze %34 : memref<1x!tpu.dma_semaphore, #tpu.memory_space<semaphore_mem>> -> memref<!tpu.dma_semaphore, #tpu.memory_space<semaphore_mem>>
    tpu.enqueue_dma source(%32 : memref<1x32xf32, #tpu.memory_space<any>>) target(%33 : memref<1x32xf32, #tpu.memory_space<vmem>>) target_semaphore(%35 : memref<!tpu.dma_semaphore, #tpu.memory_space<semaphore_mem>>)
    %c5_i32 = arith.constant 5 : i32
    %36 = arith.addi %0, %c5_i32 : i32
    %37 = arith.index_cast %36 : i32 to index
    %38 = memref.load %arg1[%37] : memref<16xi32, #tpu.memory_space<smem>>
    %c5_i32_20 = arith.constant 5 : i32
    %c0_i32_21 = arith.constant 0 : i32
    %39 = tpu.memref_slice %arg3[%38, %c0_i32_21] : memref<64x32xf32, #tpu.memory_space<any>> -> memref<1x32xf32, #tpu.memory_space<any>>
    %c5_i32_22 = arith.constant 5 : i32
    %c0_i32_23 = arith.constant 0 : i32
    %40 = tpu.memref_slice %arg8[%c5_i32_22, %c0_i32_23] : memref<8x32xf32, #tpu.memory_space<vmem>> -> memref<1x32xf32, #tpu.memory_space<vmem>>
    %41 = tpu.memref_slice %arg9[%c5_i32_20] : memref<8x!tpu.dma_semaphore, #tpu.memory_space<semaphore_mem>> -> memref<1x!tpu.dma_semaphore, #tpu.memory_space<semaphore_mem>>
    %42 = tpu.memref_squeeze %41 : memref<1x!tpu.dma_semaphore, #tpu.memory_space<semaphore_mem>> -> memref<!tpu.dma_semaphore, #tpu.memory_space<semaphore_mem>>
    tpu.enqueue_dma source(%39 : memref<1x32xf32, #tpu.memory_space<any>>) target(%40 : memref<1x32xf32, #tpu.memory_space<vmem>>) target_semaphore(%42 : memref<!tpu.dma_semaphore, #tpu.memory_space<semaphore_mem>>)
    %c6_i32 = arith.constant 6 : i32
    %43 = arith.addi %0, %c6_i32 : i32
    %44 = arith.index_cast %43 : i32 to index
    %45 = memref.load %arg1[%44] : memref<16xi32, #tpu.memory_space<smem>>
    %c6_i32_24 = arith.constant 6 : i32
    %c0_i32_25 = arith.constant 0 : i32
    %46 = tpu.memref_slice %arg3[%45, %c0_i32_25] : memref<64x32xf32, #tpu.memory_space<any>> -> memref<1x32xf32, #tpu.memory_space<any>>
    %c6_i32_26 = arith.constant 6 : i32
    %c0_i32_27 = arith.constant 0 : i32
    %47 = tpu.memref_slice %arg8[%c6_i32_26, %c0_i32_27] : memref<8x32xf32, #tpu.memory_space<vmem>> -> memref<1x32xf32, #tpu.memory_space<vmem>>
    %48 = tpu.memref_slice %arg9[%c6_i32_24] : memref<8x!tpu.dma_semaphore, #tpu.memory_space<semaphore_mem>> -> memref<1x!tpu.dma_semaphore, #tpu.memory_space<semaphore_mem>>
    %49 = tpu.memref_squeeze %48 : memref<1x!tpu.dma_semaphore, #tpu.memory_space<semaphore_mem>> -> memref<!tpu.dma_semaphore, #tpu.memory_space<semaphore_mem>>
    tpu.enqueue_dma source(%46 : memref<1x32xf32, #tpu.memory_space<any>>) target(%47 : memref<1x32xf32, #tpu.memory_space<vmem>>) target_semaphore(%49 : memref<!tpu.dma_semaphore, #tpu.memory_space<semaphore_mem>>)
    %c7_i32 = arith.constant 7 : i32
    %50 = arith.addi %0, %c7_i32 : i32
    %51 = arith.index_cast %50 : i32 to index
    %52 = memref.load %arg1[%51] : memref<16xi32, #tpu.memory_space<smem>>
    %c7_i32_28 = arith.constant 7 : i32
    %c0_i32_29 = arith.constant 0 : i32
    %53 = tpu.memref_slice %arg3[%52, %c0_i32_29] : memref<64x32xf32, #tpu.memory_space<any>> -> memref<1x32xf32, #tpu.memory_space<any>>
    %c7_i32_30 = arith.constant 7 : i32
    %c0_i32_31 = arith.constant 0 : i32
    %54 = tpu.memref_slice %arg8[%c7_i32_30, %c0_i32_31] : memref<8x32xf32, #tpu.memory_space<vmem>> -> memref<1x32xf32, #tpu.memory_space<vmem>>
    %55 = tpu.memref_slice %arg9[%c7_i32_28] : memref<8x!tpu.dma_semaphore, #tpu.memory_space<semaphore_mem>> -> memref<1x!tpu.dma_semaphore, #tpu.memory_space<semaphore_mem>>
    %56 = tpu.memref_squeeze %55 : memref<1x!tpu.dma_semaphore, #tpu.memory_space<semaphore_mem>> -> memref<!tpu.dma_semaphore, #tpu.memory_space<semaphore_mem>>
    tpu.enqueue_dma source(%53 : memref<1x32xf32, #tpu.memory_space<any>>) target(%54 : memref<1x32xf32, #tpu.memory_space<vmem>>) target_semaphore(%56 : memref<!tpu.dma_semaphore, #tpu.memory_space<semaphore_mem>>)
    %c0 = arith.constant 0 : index
    %c0_32 = arith.constant 0 : index
    %57 = vector.load %arg2[%c0, %c0_32] : memref<8x5xi32, #tpu.memory_space<vmem>>, vector<8x5xi32>
    %58 = tpu.iota {dimensions = array<i32: 1>} : vector<8x256xi32>
    %cst = arith.constant 0.000000e+00 : bf16
    %59 = vector.broadcast %cst : bf16 to vector<8x256xbf16>
    %60 = vector.extract_strided_slice %57 {offsets = [0, 0], sizes = [8, 1], strides = [1, 1]} : vector<8x5xi32> to vector<8x1xi32>
    %61 = vector.broadcast %60 : vector<8x1xi32> to vector<8x256xi32>
    %62 = arith.cmpi eq, %58, %61 : vector<8x256xi32>
    %63 = arith.extui %62 : vector<8x256xi1> to vector<8x256xi32>
    %64 = arith.sitofp %63 : vector<8x256xi32> to vector<8x256xf32>
    %65 = arith.truncf %64 : vector<8x256xf32> to vector<8x256xbf16>
    %66 = arith.addf %59, %65 : vector<8x256xbf16>
    %67 = vector.extract_strided_slice %57 {offsets = [0, 1], sizes = [8, 1], strides = [1, 1]} : vector<8x5xi32> to vector<8x1xi32>
    %68 = vector.broadcast %67 : vector<8x1xi32> to vector<8x256xi32>
    %69 = arith.cmpi eq, %58, %68 : vector<8x256xi32>
    %70 = arith.extui %69 : vector<8x256xi1> to vector<8x256xi32>
    %71 = arith.sitofp %70 : vector<8x256xi32> to vector<8x256xf32>
    %72 = arith.truncf %71 : vector<8x256xf32> to vector<8x256xbf16>
    %73 = arith.addf %66, %72 : vector<8x256xbf16>
    %74 = vector.extract_strided_slice %57 {offsets = [0, 2], sizes = [8, 1], strides = [1, 1]} : vector<8x5xi32> to vector<8x1xi32>
    %75 = vector.broadcast %74 : vector<8x1xi32> to vector<8x256xi32>
    %76 = arith.cmpi eq, %58, %75 : vector<8x256xi32>
    %77 = arith.extui %76 : vector<8x256xi1> to vector<8x256xi32>
    %78 = arith.sitofp %77 : vector<8x256xi32> to vector<8x256xf32>
    %79 = arith.truncf %78 : vector<8x256xf32> to vector<8x256xbf16>
    %80 = arith.addf %73, %79 : vector<8x256xbf16>
    %81 = vector.extract_strided_slice %57 {offsets = [0, 3], sizes = [8, 1], strides = [1, 1]} : vector<8x5xi32> to vector<8x1xi32>
    %82 = vector.broadcast %81 : vector<8x1xi32> to vector<8x256xi32>
    %83 = arith.cmpi eq, %58, %82 : vector<8x256xi32>
    %84 = arith.extui %83 : vector<8x256xi1> to vector<8x256xi32>
    %85 = arith.sitofp %84 : vector<8x256xi32> to vector<8x256xf32>
    %86 = arith.truncf %85 : vector<8x256xf32> to vector<8x256xbf16>
    %87 = arith.addf %80, %86 : vector<8x256xbf16>
    %88 = vector.extract_strided_slice %57 {offsets = [0, 4], sizes = [8, 1], strides = [1, 1]} : vector<8x5xi32> to vector<8x1xi32>
    %89 = vector.broadcast %88 : vector<8x1xi32> to vector<8x256xi32>
    %90 = arith.cmpi eq, %58, %89 : vector<8x256xi32>
    %91 = arith.extui %90 : vector<8x256xi1> to vector<8x256xi32>
    %92 = arith.sitofp %91 : vector<8x256xi32> to vector<8x256xf32>
    %93 = arith.truncf %92 : vector<8x256xf32> to vector<8x256xbf16>
    %94 = arith.addf %87, %93 : vector<8x256xbf16>
    %c0_33 = arith.constant 0 : index
    %c0_34 = arith.constant 0 : index
    %95 = vector.load %arg4[%c0_33, %c0_34] : memref<256x32xbf16, #tpu.memory_space<vmem>>, vector<256x32xbf16>
    %cst_35 = arith.constant dense<0.000000e+00> : vector<8x32xf32>
    %96 = tpu.matmul %94, %95, %cst_35 {dimension_numbers = #tpu.dot_dimension_numbers<[1], [0], [0], [1], [0, 0, 1, 1], [], []>} : vector<8x256xbf16>, vector<256x32xbf16>, vector<8x32xf32> -> vector<8x32xf32>
    %c0_i32_36 = arith.constant 0 : i32
    %c8_i32_37 = arith.constant 8 : i32
    %97 = arith.addi %c0_i32_36, %c8_i32_37 : i32
    %c1_i32_38 = arith.constant 1 : i32
    scf.for %arg10 = %c0_i32_36 to %97 step %c1_i32_38  : i32 {
      %c8_i32_53 = arith.constant 8 : i32
      %c0_i32_54 = arith.constant 0 : i32
      %127 = arith.cmpi eq, %c8_i32_53, %c0_i32_54 : i32
      %c1_i32_55 = arith.constant 1 : i32
      %128 = arith.select %127, %c1_i32_55, %c8_i32_53 : i32
      %129 = arith.remsi %arg10, %128 : i32
      %c0_i32_56 = arith.constant 0 : i32
      %130 = arith.cmpi ne, %129, %c0_i32_56 : i32
      %c0_i32_57 = arith.constant 0 : i32
      %131 = arith.cmpi slt, %129, %c0_i32_57 : i32
      %c0_i32_58 = arith.constant 0 : i32
      %132 = arith.cmpi slt, %128, %c0_i32_58 : i32
      %133 = arith.xori %131, %132 : i1
      %134 = arith.andi %133, %130 : i1
      %135 = arith.addi %129, %128 : i32
      %136 = arith.select %134, %135, %129 : i32
      %c0_i32_59 = arith.constant 0 : i32
      %c0_i32_60 = arith.constant 0 : i32
      %137 = tpu.memref_slice %arg3[%c0_i32_59, %c0_i32_60] : memref<64x32xf32, #tpu.memory_space<any>> -> memref<1x32xf32, #tpu.memory_space<any>>
      %c0_i32_61 = arith.constant 0 : i32
      %138 = tpu.memref_slice %arg8[%arg10, %c0_i32_61] : memref<8x32xf32, #tpu.memory_space<vmem>> -> memref<1x32xf32, #tpu.memory_space<vmem>>
      %139 = tpu.memref_slice %arg9[%136] : memref<8x!tpu.dma_semaphore, #tpu.memory_space<semaphore_mem>> -> memref<1x!tpu.dma_semaphore, #tpu.memory_space<semaphore_mem>>
      %140 = tpu.memref_squeeze %139 : memref<1x!tpu.dma_semaphore, #tpu.memory_space<semaphore_mem>> -> memref<!tpu.dma_semaphore, #tpu.memory_space<semaphore_mem>>
      tpu.wait_dma2 semaphore(%140 : memref<!tpu.dma_semaphore, #tpu.memory_space<semaphore_mem>>) src(%137 : memref<1x32xf32, #tpu.memory_space<any>>) dst(%138 : memref<1x32xf32, #tpu.memory_space<vmem>>)
      %c8_i32_62 = arith.constant 8 : i32
      %141 = arith.addi %arg10, %c8_i32_62 : i32
      %c8_i32_63 = arith.constant 8 : i32
      %142 = arith.cmpi slt, %141, %c8_i32_63 : i32
      %143 = arith.extui %142 : i1 to i32
      %c0_i32_64 = arith.constant 0 : i32
      %144 = arith.cmpi ne, %143, %c0_i32_64 : i32
      scf.if %144 {
        %c8_i32_65 = arith.constant 8 : i32
        %145 = arith.addi %arg10, %c8_i32_65 : i32
        %146 = arith.addi %0, %145 : i32
        %147 = arith.index_cast %146 : i32 to index
        %148 = memref.load %arg1[%147] : memref<16xi32, #tpu.memory_space<smem>>
        %c8_i32_66 = arith.constant 8 : i32
        %c0_i32_67 = arith.constant 0 : i32
        %149 = arith.cmpi eq, %c8_i32_66, %c0_i32_67 : i32
        %c1_i32_68 = arith.constant 1 : i32
        %150 = arith.select %149, %c1_i32_68, %c8_i32_66 : i32
        %151 = arith.remsi %145, %150 : i32
        %c0_i32_69 = arith.constant 0 : i32
        %152 = arith.cmpi ne, %151, %c0_i32_69 : i32
        %c0_i32_70 = arith.constant 0 : i32
        %153 = arith.cmpi slt, %151, %c0_i32_70 : i32
        %c0_i32_71 = arith.constant 0 : i32
        %154 = arith.cmpi slt, %150, %c0_i32_71 : i32
        %155 = arith.xori %153, %154 : i1
        %156 = arith.andi %155, %152 : i1
        %157 = arith.addi %151, %150 : i32
        %158 = arith.select %156, %157, %151 : i32
        %c0_i32_72 = arith.constant 0 : i32
        %159 = tpu.memref_slice %arg3[%148, %c0_i32_72] : memref<64x32xf32, #tpu.memory_space<any>> -> memref<1x32xf32, #tpu.memory_space<any>>
        %c0_i32_73 = arith.constant 0 : i32
        %160 = tpu.memref_slice %arg8[%145, %c0_i32_73] : memref<8x32xf32, #tpu.memory_space<vmem>> -> memref<1x32xf32, #tpu.memory_space<vmem>>
        %161 = tpu.memref_slice %arg9[%158] : memref<8x!tpu.dma_semaphore, #tpu.memory_space<semaphore_mem>> -> memref<1x!tpu.dma_semaphore, #tpu.memory_space<semaphore_mem>>
        %162 = tpu.memref_squeeze %161 : memref<1x!tpu.dma_semaphore, #tpu.memory_space<semaphore_mem>> -> memref<!tpu.dma_semaphore, #tpu.memory_space<semaphore_mem>>
        tpu.enqueue_dma source(%159 : memref<1x32xf32, #tpu.memory_space<any>>) target(%160 : memref<1x32xf32, #tpu.memory_space<vmem>>) target_semaphore(%162 : memref<!tpu.dma_semaphore, #tpu.memory_space<semaphore_mem>>)
      } else {
      }
    }
    %c8_i32_39 = arith.constant 8 : i32
    %c0_40 = arith.constant 0 : index
    %c0_41 = arith.constant 0 : index
    %98 = vector.load %arg8[%c0_40, %c0_41] : memref<8x32xf32, #tpu.memory_space<vmem>>, vector<8x32xf32>
    %99 = arith.addf %98, %96 : vector<8x32xf32>
    %cst_42 = arith.constant dense<0.000000e+00> : vector<8xf32>
    %100 = vector.multi_reduction <add>, %99, %cst_42 [1] : vector<8x32xf32> to vector<8xf32>
    %101 = vector.shape_cast %100 : vector<8xf32> to vector<8x1xf32>
    %cst_43 = arith.constant 3.200000e+01 : f32
    %102 = vector.broadcast %cst_43 : f32 to vector<8x1xf32>
    %103 = arith.divf %101, %102 : vector<8x1xf32>
    %104 = vector.broadcast %103 : vector<8x1xf32> to vector<8x32xf32>
    %105 = arith.subf %99, %104 : vector<8x32xf32>
    %106 = arith.mulf %105, %105 : vector<8x32xf32>
    %cst_44 = arith.constant dense<0.000000e+00> : vector<8xf32>
    %107 = vector.multi_reduction <add>, %106, %cst_44 [1] : vector<8x32xf32> to vector<8xf32>
    %108 = vector.shape_cast %107 : vector<8xf32> to vector<8x1xf32>
    %cst_45 = arith.constant 3.200000e+01 : f32
    %109 = vector.broadcast %cst_45 : f32 to vector<8x1xf32>
    %110 = arith.divf %108, %109 : vector<8x1xf32>
    %cst_46 = arith.constant 9.99999996E-13 : f32
    %111 = vector.broadcast %cst_46 : f32 to vector<8x1xf32>
    %112 = arith.addf %110, %111 : vector<8x1xf32>
    %113 = math.rsqrt %112 : vector<8x1xf32>
    %114 = vector.broadcast %113 : vector<8x1xf32> to vector<8x32xf32>
    %115 = arith.mulf %105, %114 : vector<8x32xf32>
    %c0_47 = arith.constant 0 : index
    %c0_48 = arith.constant 0 : index
    %116 = vector.load %arg5[%c0_47, %c0_48] : memref<1x32xf32, #tpu.memory_space<vmem>>, vector<1x32xf32>
    %117 = vector.shape_cast %116 : vector<1x32xf32> to vector<32xf32>
    %118 = vector.shape_cast %117 : vector<32xf32> to vector<1x32xf32>
    %119 = vector.broadcast %118 : vector<1x32xf32> to vector<8x32xf32>
    %120 = arith.mulf %115, %119 : vector<8x32xf32>
    %c0_49 = arith.constant 0 : index
    %c0_50 = arith.constant 0 : index
    %121 = vector.load %arg6[%c0_49, %c0_50] : memref<1x32xf32, #tpu.memory_space<vmem>>, vector<1x32xf32>
    %122 = vector.shape_cast %121 : vector<1x32xf32> to vector<32xf32>
    %123 = vector.shape_cast %122 : vector<32xf32> to vector<1x32xf32>
    %124 = vector.broadcast %123 : vector<1x32xf32> to vector<8x32xf32>
    %125 = arith.addf %120, %124 : vector<8x32xf32>
    %c0_51 = arith.constant 0 : index
    %c0_52 = arith.constant 0 : index
    %126 = vector.load %arg7[%c0_51, %c0_52] : memref<8x32xf32, #tpu.memory_space<vmem>>, vector<8x32xf32>
    tpu.vector_store %arg7[%c0_51, %c0_52], %125 {strides = array<i32>} : memref<8x32xf32, #tpu.memory_space<vmem>>, vector<8x32xf32>,
    return
  }
  func.func @transform_0(%arg0: i32, %arg1: memref<16xi32, #tpu.memory_space<smem>>) -> (i32, i32) {
    %c0_i32 = arith.constant 0 : i32
    %c0_i32_0 = arith.constant 0 : i32
    return %arg0, %c0_i32 : i32, i32
  }
  func.func @transform_2(%arg0: i32, %arg1: memref<16xi32, #tpu.memory_space<smem>>) -> (i32, i32) {
    %c0_i32 = arith.constant 0 : i32
    %c0_i32_0 = arith.constant 0 : i32
    %c0_i32_1 = arith.constant 0 : i32
    return %c0_i32, %c0_i32_0 : i32, i32
  }
  func.func @transform_3(%arg0: i32, %arg1: memref<16xi32, #tpu.memory_space<smem>>) -> (i32, i32) {
    %c0_i32 = arith.constant 0 : i32
    %c0_i32_0 = arith.constant 0 : i32
    %c0_i32_1 = arith.constant 0 : i32
    return %c0_i32, %c0_i32_0 : i32, i32
  }
  func.func @transform_4(%arg0: i32, %arg1: memref<16xi32, #tpu.memory_space<smem>>) -> (i32, i32) {
    %c0_i32 = arith.constant 0 : i32
    %c0_i32_0 = arith.constant 0 : i32
    %c0_i32_1 = arith.constant 0 : i32
    return %c0_i32, %c0_i32_0 : i32, i32
  }
  func.func @transform_5(%arg0: i32, %arg1: memref<16xi32, #tpu.memory_space<smem>>) -> (i32, i32) {
    %c0_i32 = arith.constant 0 : i32
    %c0_i32_0 = arith.constant 0 : i32
    return %arg0, %c0_i32 : i32, i32
  }
}

</mosaic_0001>

<llo_original>
// kernel: tpu_custom_call.1
$region0: #{tpu_custom_call.1}
  #allocation0 [shape = 'u32[]', space=smem, size = 0x4, offset = 0x4, fixed_abs, tag = 'smem constant byte address 0x4 - core index']
  #allocation1 [shape = 'u32[72,128]{1,0:T(1,128)}', space=vmem, size = 0x9000, scoped, tag = 'internal scratch']
  #allocation2 [shape = 'f32[8,32]{1,0:T(8,128)}', space=vmem, size = 0x1000, scoped, tag = 'scratch operand']
  #allocation3 [shape = 's32[8]{0}', space=sflag, size = 0x20, scoped, tag = 'scratch operand']
  #allocation4 [shape = 's32[1]{0}', space=sflag, size = 0x4, scoped, tag = 'scoped memory for tpu_custom_call.1']
  #allocation5 [shape = 'u8[512]{0}', space=smem, size = 0x200, scoped, tag = 'prefetched SMEM operand 0']
  #allocation8 [shape = 's32[]', space=sflag, size = 0x4, offset = 0, fixed_abs, tag = 'sflag constant byte address 0x0 - dummy sync flag']
  #allocation9 [shape = 's32[]', space=sflag, size = 0x4, offset = 0, fixed_abs, tag = 'sflag constant byte address 0x0 - dummy sync flag']
  #allocation10 [shape = 's32[]', space=sflag, size = 0x4, offset = 0, fixed_abs, tag = 'sflag constant byte address 0x0 - dummy sync flag']
  #allocation11 [shape = 's32[]', space=sflag, size = 0x4, offset = 0, fixed_abs, tag = 'sflag constant byte address 0x0 - dummy sync flag']
  #allocation12 [shape = 's32[]', space=sflag, size = 0x4, offset = 0, fixed_abs, tag = 'sflag constant byte address 0x0 - dummy sync flag']
  #allocation13 [shape = 's32[]', space=sflag, size = 0x4, offset = 0, fixed_abs, tag = 'sflag constant byte address 0x0 - dummy sync flag']
  #allocation14 [shape = 's32[]', space=sflag, size = 0x4, offset = 0, fixed_abs, tag = 'sflag constant byte address 0x0 - dummy sync flag']
  #allocation15 [shape = 's32[]', space=sflag, size = 0x4, offset = 0, fixed_abs, tag = 'sflag constant byte address 0x0 - dummy sync flag']
  #allocation16 [shape = 's32[]', space=sflag, size = 0x4, offset = 0, fixed_abs, tag = 'sflag constant byte address 0x0 - dummy sync flag']
  %s0 = inlined_call_operand.vmem [shape: s32[16], index: 0, kind: input, shape index: {}]
  %s1 = inlined_call_operand.vmem [shape: s32[16,5], index: 1, kind: input, shape index: {}]
  %s2 = inlined_call_operand.vmem [shape: f32[64,32], index: 2, kind: input, shape index: {}]
  %s3 = inlined_call_operand.vmem [shape: bf16[256,32], index: 3, kind: input, shape index: {}]
  %s4 = inlined_call_operand.vmem [shape: f32[1,32], index: 4, kind: input, shape index: {}]
  %s5 = inlined_call_operand.vmem [shape: f32[1,32], index: 5, kind: input, shape index: {}]
  %s6 = inlined_call_operand.hbm [shape: f32[16,32], index: 6, kind: output, shape index: {}]
  %s7 = sld [smem:[#allocation0]]
  $region330: #{tpu_custom_call.1} parent=0
    _
  %s9 = ssub.s32 1, %s7
  %s10 = scalar_select 0, %s9, %s7
  %s12 = sshll.u32 %s0, 4
  %s13 = int_to_ptr.vmem [resolvable:$true] %s12
  %15 = dma.vmem_to_smem %s13, 16, [#allocation5], [#allocation4]
  %17 = dma.done [#allocation4], 16
  %18 = sfence
  $region1: #{tpu_custom_call.1} parent=0
    #allocation6 [shape = 'u8[8192]{0}', space=vmem, size = 0x2000, scoped, tag = 'output window, operand 0']
    #allocation7 [shape = 's32[2]{0}', space=sflag, size = 0x8, scoped, tag = 'scoped memory for tpu_custom_call.1']
    %19 = vsyncpa [#allocation7], 0
    %s20 = scalar_lea.sflag [#allocation7], 1
    %21 = vsyncpa %s20, 0
    loop: start=0, step=1, limit=4
    $region2: #{tpu_custom_call.1} parent=1 // loop_pre_header
      _
    $region3: #{tpu_custom_call.1} parent=1 // loop_header
      %s23 = sphi 0, %s27
      %p24 = scmp.ge.s32.totalorder %s23, 4
      %s33 = sphi 0, %s35
      %s36 = sphi 0, %s33
      %s37 = sphi 0, %s36
      %s53 = sphi 0, %s37
      %s57 = sphi 0, %s57
      %s59 = sphi 0, %s57
      %s60 = sphi 0, %s59
      %s74 = sphi 0, %s60
      %s78 = sphi 0, %s78
      %s80 = sphi 0, %s78
      %s81 = sphi 0, %s80
      %s95 = sphi 0, %s81
      %s99 = sphi 0, %s99
      %s101 = sphi 0, %s99
      %s102 = sphi 0, %s101
      %s116 = sphi 0, %s102
      %s122 = sphi 0, %s124
      %s125 = sphi 0, %s122
      %s126 = sphi 0, %s125
      %s142 = sphi 0, %s126
    $region4: #{tpu_custom_call.1} parent=1 // loop_header_branch
      %26 = sbr.rel (%p24) target = $region8
    $region5: #{tpu_custom_call.1} parent=1 // loop_body
      %s28 = ssub.s32 %s23, 1
      %s29 = ssub.s32 %s23, 2
      %s30 = sadd.s32 %s23, 1
      %s31 = ssub.s32 %s23, %s30
      %p32 = scmp.eq.s32.totalorder %s31, 0
      %s34 = sadd.s32 %s33, 1
      %s35 = scalar_select %p32, %s33, %s34
      %p38 = pneg %p32
      %p39 = scmp.eq.s32.totalorder %s23, 1
      %p40 = por %p38, %p39
      %p41 = scmp.ne.s32.totalorder %s33, %s36
      %p42 = scmp.eq.s32.totalorder %s23, 0
      %p43 = por %p41, %p42
      %p44 = scmp.ne.s32.totalorder %s33, %s36
      %p45 = scmp.eq.s32.totalorder %s28, 1
      %p46 = por %p44, %p45
      %p47 = scmp.ne.s32.totalorder %s36, %s37
      %p48 = scmp.eq.s32.totalorder %s28, 0
      %p49 = por %p47, %p48
      %p50 = scmp.ne.s32.totalorder %s36, %s37
      %p51 = scmp.eq.s32.totalorder %s29, 1
      %p52 = por %p50, %p51
      %p54 = scmp.ne.s32.totalorder %s37, %s53
      %p55 = scmp.eq.s32.totalorder %s29, 0
      %p56 = por %p54, %p55
      %s58 = sadd.s32 %s57, 1
      %p61 = scmp.eq.s32.totalorder %s23, 1
      %p62 = scmp.ne.s32.totalorder %s57, %s59
      %p63 = scmp.eq.s32.totalorder %s23, 0
      %p64 = por %p62, %p63
      %p65 = scmp.ne.s32.totalorder %s57, %s59
      %p66 = scmp.eq.s32.totalorder %s28, 1
      %p67 = por %p65, %p66
      %p68 = scmp.ne.s32.totalorder %s59, %s60
      %p69 = scmp.eq.s32.totalorder %s28, 0
      %p70 = por %p68, %p69
      %p71 = scmp.ne.s32.totalorder %s59, %s60
      %p72 = scmp.eq.s32.totalorder %s29, 1
      %p73 = por %p71, %p72
      %p75 = scmp.ne.s32.totalorder %s60, %s74
      %p76 = scmp.eq.s32.totalorder %s29, 0
      %p77 = por %p75, %p76
      %s79 = sadd.s32 %s78, 1
      %p82 = scmp.eq.s32.totalorder %s23, 1
      %p83 = scmp.ne.s32.totalorder %s78, %s80
      %p84 = scmp.eq.s32.totalorder %s23, 0
      %p85 = por %p83, %p84
      %p86 = scmp.ne.s32.totalorder %s78, %s80
      %p87 = scmp.eq.s32.totalorder %s28, 1
      %p88 = por %p86, %p87
      %p89 = scmp.ne.s32.totalorder %s80, %s81
      %p90 = scmp.eq.s32.totalorder %s28, 0
      %p91 = por %p89, %p90
      %p92 = scmp.ne.s32.totalorder %s80, %s81
      %p93 = scmp.eq.s32.totalorder %s29, 1
      %p94 = por %p92, %p93
      %p96 = scmp.ne.s32.totalorder %s81, %s95
      %p97 = scmp.eq.s32.totalorder %s29, 0
      %p98 = por %p96, %p97
      %s100 = sadd.s32 %s99, 1
      %p103 = scmp.eq.s32.totalorder %s23, 1
      %p104 = scmp.ne.s32.totalorder %s99, %s101
      %p105 = scmp.eq.s32.totalorder %s23, 0
      %p106 = por %p104, %p105
      %p107 = scmp.ne.s32.totalorder %s99, %s101
      %p108 = scmp.eq.s32.totalorder %s28, 1
      %p109 = por %p107, %p108
      %p110 = scmp.ne.s32.totalorder %s101, %s102
      %p111 = scmp.eq.s32.totalorder %s28, 0
      %p112 = por %p110, %p111
      %p113 = scmp.ne.s32.totalorder %s101, %s102
      %p114 = scmp.eq.s32.totalorder %s29, 1
      %p115 = por %p113, %p114
      %p117 = scmp.ne.s32.totalorder %s102, %s116
      %p118 = scmp.eq.s32.totalorder %s29, 0
      %p119 = por %p117, %p118
      %s120 = ssub.s32 %s23, %s30
      %p121 = scmp.eq.s32.totalorder %s120, 0
      %s123 = sadd.s32 %s122, 1
      %s124 = scalar_select %p121, %s122, %s123
      %p127 = pneg %p121
      %p128 = scmp.eq.s32.totalorder %s23, 1
      %p129 = por %p127, %p128
      %p130 = scmp.ne.s32.totalorder %s122, %s125
      %p131 = scmp.eq.s32.totalorder %s23, 0
      %p132 = por %p130, %p131
      %p133 = scmp.ne.s32.totalorder %s122, %s125
      %p134 = scmp.eq.s32.totalorder %s28, 1
      %p135 = por %p133, %p134
      %p136 = scmp.ne.s32.totalorder %s125, %s126
      %p137 = scmp.eq.s32.totalorder %s28, 0
      %p138 = por %p136, %p137
      %p139 = scmp.ne.s32.totalorder %s125, %s126
      %p140 = scmp.eq.s32.totalorder %s29, 1
      %p141 = por %p139, %p140
      %p143 = scmp.ne.s32.totalorder %s126, %s142
      %p144 = scmp.eq.s32.totalorder %s29, 0
      %p145 = por %p143, %p144
      %p146 = scmp.le.s32.totalorder 1, %s23
      %p147 = scmp.lt.s32.totalorder %s23, 3
      %p148 = pnand %p146, %p147
      %p149 = pneg %p148
      // Predicated region
      $region9: #{tpu_custom_call.1} parent=5 // pred_check
        _
      $region10: #{tpu_custom_call.1} parent=5 // pred_check_branch
        %151 = sbr.rel (%p148) target = $region12
      $region11: #{tpu_custom_call.1} parent=5 // pred_region
        %s152 = ssub.s32 %s23, 1
        // Predicated region
        $region13: #{tpu_custom_call.1} parent=11 // pred_check
          %p153 = pneg %p70
        $region14: #{tpu_custom_call.1} parent=11 // pred_check_branch
          %155 = sbr.rel (%p153) target = $region16
        $region15: #{tpu_custom_call.1} parent=11 // pred_region
          _
        $region16: #{tpu_custom_call.1} parent=11 // pred_fallthru
          _
        // Predicated region
        $region17: #{tpu_custom_call.1} parent=11 // pred_check
          %p156 = pneg %p91
        $region18: #{tpu_custom_call.1} parent=11 // pred_check_branch
          %158 = sbr.rel (%p156) target = $region20
        $region19: #{tpu_custom_call.1} parent=11 // pred_region
          _
        $region20: #{tpu_custom_call.1} parent=11 // pred_fallthru
          _
        // Predicated region
        $region21: #{tpu_custom_call.1} parent=11 // pred_check
          %p159 = pneg %p112
        $region22: #{tpu_custom_call.1} parent=11 // pred_check_branch
          %161 = sbr.rel (%p159) target = $region24
        $region23: #{tpu_custom_call.1} parent=11 // pred_region
          _
        $region24: #{tpu_custom_call.1} parent=11 // pred_fallthru
          _
      $region12: #{tpu_custom_call.1} parent=5 // pred_fallthru
        _
      %p162 = scmp.lt.s32.totalorder %s23, 2
      // Predicated region
      $region25: #{tpu_custom_call.1} parent=5 // pred_check
        %p163 = pneg %p162
      $region26: #{tpu_custom_call.1} parent=5 // pred_check_branch
        %165 = sbr.rel (%p163) target = $region28
      $region27: #{tpu_custom_call.1} parent=5 // pred_region
        // Predicated region
        $region29: #{tpu_custom_call.1} parent=27 // pred_check
          %p166 = pneg %p43
        $region30: #{tpu_custom_call.1} parent=27 // pred_check_branch
          %168 = sbr.rel (%p166) target = $region32
        $region31: #{tpu_custom_call.1} parent=27 // pred_region
          %p169 = scmp.lt.s32.totalorder %s23, 1
          %s170 = scalar_select %p169, %s23, 1
          %s171 = smul.addr %s170, 8
          %s172 = scalar_lea.vmem %s1, %s171
        $region32: #{tpu_custom_call.1} parent=27 // pred_fallthru
          _
      $region28: #{tpu_custom_call.1} parent=5 // pred_fallthru
        _
      %p173 = scmp.le.s32.totalorder 1, %s23
      %p174 = scmp.lt.s32.totalorder %s23, 3
      %p175 = pnand %p173, %p174
      %p176 = pneg %p175
      // Predicated region
      $region33: #{tpu_custom_call.1} parent=5 // pred_check
        _
      $region34: #{tpu_custom_call.1} parent=5 // pred_check_branch
        %178 = sbr.rel (%p175) target = $region36
      $region35: #{tpu_custom_call.1} parent=5 // pred_region
        %s179 = ssub.s32 %s23, 1
        %p180 = scmp.lt.s32.totalorder %s28, 1
        %s181 = scalar_select %p180, %s28, 1
        %s182 = smul.addr %s181, 8
        %s183 = scalar_lea.vmem %s1, %s182
        %p184 = pneg %p49
        %p185 = pneg %p46
        %p186 = pneg %p70
        %p187 = pneg %p67
        %p188 = pneg %p91
        %p189 = pneg %p88
        %p190 = pneg %p112
        %p191 = pneg %p109
        %p192 = pneg %p138
        %p193 = pneg %p135
        %s194 = sand.u32 %s125, 1
        %s195 = scalar_lea.sflag [#allocation7], %s194
        %s196 = sand.u32 %s125, 1
        %s197 = smul.addr %s196, 8
        %s198 = scalar_lea.vmem [#allocation6], %s197
        %p199 = scmp.lt.s32.totalorder %s28, 1
        %s200 = scalar_select %p199, %s28, 1
        %s201 = smul.addr %s200, 8
        %s202 = scalar_lea.vmem %s1, %s201
        %s203 = smul.u32 %s28, 8
        %s204 = sld [smem:[#allocation5 + %s203]]
        %s205 = scalar_lea.vmem %s2, %s204
        // Predicated region
        $region37: #{tpu_custom_call.1} parent=35 // pred_check
          _
        $region38: #{tpu_custom_call.1} parent=35 // pred_check_branch
          %207 = sbr.rel target = $region40
        $region39: #{tpu_custom_call.1} parent=35 // pred_region
          // Predicated region
          $region52: #{tpu_custom_call.1} parent=39 // pred_check
            _
          $region53: #{tpu_custom_call.1} parent=39 // pred_check_branch
            %223 = sbr.rel (0) target = $region55
          $region54: #{tpu_custom_call.1} parent=39 // pred_region
            %s225 = ssub.s32 2, 1
            loop: start=0, step=1, limit=1
            $region56: #{tpu_custom_call.1} parent=54 // loop_pre_header
              _
            $region57: #{tpu_custom_call.1} parent=54 // loop_header
              %s227 = sphi 0, %s231
              %p228 = scmp.ge.s32.totalorder %s227, 1
              %s232 = sphi %s205, %s205
              %s233 = sphi [#allocation2], [#allocation2]
            $region58: #{tpu_custom_call.1} parent=54 // loop_header_branch
              %230 = sbr.rel (%p228) target = $region62
            $region59: #{tpu_custom_call.1} parent=54 // loop_body
              %v234 = vld [vmem:[%s232] sm:%s225]
              %235 = vst [vmem:[%s233] sm:%s225] %v234
            $region60: #{tpu_custom_call.1} parent=54 // loop_footer
              %s231 = sadd.s32 1, %s227
            $region61: #{tpu_custom_call.1} parent=54 // loop_footer_branch
              %226 = sbr.rel target = $region57
            $region62: #{tpu_custom_call.1} parent=54 // loop_exit
              _
          $region55: #{tpu_custom_call.1} parent=39 // pred_fallthru
            _
        $region40: #{tpu_custom_call.1} parent=35 // pred_fallthru
          _
        // Predicated region
        $region41: #{tpu_custom_call.1} parent=35 // pred_check
          _
        $region42: #{tpu_custom_call.1} parent=35 // pred_check_branch
          %209 = sbr.rel (0) target = $region44
        $region43: #{tpu_custom_call.1} parent=35 // pred_region
          %s211 = ssub.s32 2, 1
          loop: start=0, step=1, limit=1
          $region45: #{tpu_custom_call.1} parent=43 // loop_pre_header
            _
          $region46: #{tpu_custom_call.1} parent=43 // loop_header
            %s213 = sphi 0, %s217
            %p214 = scmp.ge.s32.totalorder %s213, 1
            %s218 = sphi %s205, %s205
            %s219 = sphi [#allocation2], [#allocation2]
          $region47: #{tpu_custom_call.1} parent=43 // loop_header_branch
            %216 = sbr.rel (%p214) target = $region51
          $region48: #{tpu_custom_call.1} parent=43 // loop_body
            %v220 = vld [vmem:[%s218] sm:%s211]
            %221 = vst [vmem:[%s219] sm:%s211] %v220
          $region49: #{tpu_custom_call.1} parent=43 // loop_footer
            %s217 = sadd.s32 1, %s213
          $region50: #{tpu_custom_call.1} parent=43 // loop_footer_branch
            %212 = sbr.rel target = $region46
          $region51: #{tpu_custom_call.1} parent=43 // loop_exit
            _
        $region44: #{tpu_custom_call.1} parent=35 // pred_fallthru
          _
        // Predicated region
        $region63: #{tpu_custom_call.1} parent=35 // pred_check
          _
        $region64: #{tpu_custom_call.1} parent=35 // pred_check_branch
          %238 = sbr.rel (0) target = $region66
        $region65: #{tpu_custom_call.1} parent=35 // pred_region
          %239 = vsyncadd [#allocation3], 16
        $region66: #{tpu_custom_call.1} parent=35 // pred_fallthru
          _
        %s240 = sadd.s32 %s203, 1
        %s241 = sld [smem:[#allocation5 + %s240]]
        %s242 = scalar_lea.vmem %s2, %s241
        %s243 = scalar_lea.vmem [#allocation2], 1
        %s244 = scalar_lea.sflag [#allocation3], 1
        // Predicated region
        $region67: #{tpu_custom_call.1} parent=35 // pred_check
          _
        $region68: #{tpu_custom_call.1} parent=35 // pred_check_branch
          %246 = sbr.rel target = $region70
        $region69: #{tpu_custom_call.1} parent=35 // pred_region
          // Predicated region
          $region82: #{tpu_custom_call.1} parent=69 // pred_check
            _
          $region83: #{tpu_custom_call.1} parent=69 // pred_check_branch
            %262 = sbr.rel (0) target = $region85
          $region84: #{tpu_custom_call.1} parent=69 // pred_region
            %s264 = ssub.s32 2, 1
            loop: start=0, step=1, limit=1
            $region86: #{tpu_custom_call.1} parent=84 // loop_pre_header
              _
            $region87: #{tpu_custom_call.1} parent=84 // loop_header
              %s266 = sphi 0, %s270
              %p267 = scmp.ge.s32.totalorder %s266, 1
              %s271 = sphi %s242, %s242
              %s272 = sphi %s243, %s243
            $region88: #{tpu_custom_call.1} parent=84 // loop_header_branch
              %269 = sbr.rel (%p267) target = $region92
            $region89: #{tpu_custom_call.1} parent=84 // loop_body
              %v273 = vld [vmem:[%s271] sm:%s264]
              %274 = vst [vmem:[%s272] sm:%s264] %v273
            $region90: #{tpu_custom_call.1} parent=84 // loop_footer
              %s270 = sadd.s32 1, %s266
            $region91: #{tpu_custom_call.1} parent=84 // loop_footer_branch
              %265 = sbr.rel target = $region87
            $region92: #{tpu_custom_call.1} parent=84 // loop_exit
              _
          $region85: #{tpu_custom_call.1} parent=69 // pred_fallthru
            _
        $region70: #{tpu_custom_call.1} parent=35 // pred_fallthru
          _
        // Predicated region
        $region71: #{tpu_custom_call.1} parent=35 // pred_check
          _
        $region72: #{tpu_custom_call.1} parent=35 // pred_check_branch
          %248 = sbr.rel (0) target = $region74
        $region73: #{tpu_custom_call.1} parent=35 // pred_region
          %s250 = ssub.s32 2, 1
          loop: start=0, step=1, limit=1
          $region75: #{tpu_custom_call.1} parent=73 // loop_pre_header
            _
          $region76: #{tpu_custom_call.1} parent=73 // loop_header
            %s252 = sphi 0, %s256
            %p253 = scmp.ge.s32.totalorder %s252, 1
            %s257 = sphi %s242, %s242
            %s258 = sphi %s243, %s243
          $region77: #{tpu_custom_call.1} parent=73 // loop_header_branch
            %255 = sbr.rel (%p253) target = $region81
          $region78: #{tpu_custom_call.1} parent=73 // loop_body
            %v259 = vld [vmem:[%s257] sm:%s250]
            %260 = vst [vmem:[%s258] sm:%s250] %v259
          $region79: #{tpu_custom_call.1} parent=73 // loop_footer
            %s256 = sadd.s32 1, %s252
          $region80: #{tpu_custom_call.1} parent=73 // loop_footer_branch
            %251 = sbr.rel target = $region76
          $region81: #{tpu_custom_call.1} parent=73 // loop_exit
            _
        $region74: #{tpu_custom_call.1} parent=35 // pred_fallthru
          _
        // Predicated region
        $region93: #{tpu_custom_call.1} parent=35 // pred_check
          _
        $region94: #{tpu_custom_call.1} parent=35 // pred_check_branch
          %277 = sbr.rel (0) target = $region96
        $region95: #{tpu_custom_call.1} parent=35 // pred_region
          %278 = vsyncadd %s244, 16
        $region96: #{tpu_custom_call.1} parent=35 // pred_fallthru
          _
        %s279 = sadd.s32 %s203, 2
        %s280 = sld [smem:[#allocation5 + %s279]]
        %s281 = scalar_lea.vmem %s2, %s280
        %s282 = scalar_lea.vmem [#allocation2], 2
        %s283 = scalar_lea.sflag [#allocation3], 2
        // Predicated region
        $region97: #{tpu_custom_call.1} parent=35 // pred_check
          _
        $region98: #{tpu_custom_call.1} parent=35 // pred_check_branch
          %285 = sbr.rel target = $region100
        $region99: #{tpu_custom_call.1} parent=35 // pred_region
          // Predicated region
          $region112: #{tpu_custom_call.1} parent=99 // pred_check
            _
          $region113: #{tpu_custom_call.1} parent=99 // pred_check_branch
            %301 = sbr.rel (0) target = $region115
          $region114: #{tpu_custom_call.1} parent=99 // pred_region
            %s303 = ssub.s32 2, 1
            loop: start=0, step=1, limit=1
            $region116: #{tpu_custom_call.1} parent=114 // loop_pre_header
              _
            $region117: #{tpu_custom_call.1} parent=114 // loop_header
              %s305 = sphi 0, %s309
              %p306 = scmp.ge.s32.totalorder %s305, 1
              %s310 = sphi %s281, %s281
              %s311 = sphi %s282, %s282
            $region118: #{tpu_custom_call.1} parent=114 // loop_header_branch
              %308 = sbr.rel (%p306) target = $region122
            $region119: #{tpu_custom_call.1} parent=114 // loop_body
              %v312 = vld [vmem:[%s310] sm:%s303]
              %313 = vst [vmem:[%s311] sm:%s303] %v312
            $region120: #{tpu_custom_call.1} parent=114 // loop_footer
              %s309 = sadd.s32 1, %s305
            $region121: #{tpu_custom_call.1} parent=114 // loop_footer_branch
              %304 = sbr.rel target = $region117
            $region122: #{tpu_custom_call.1} parent=114 // loop_exit
              _
          $region115: #{tpu_custom_call.1} parent=99 // pred_fallthru
            _
        $region100: #{tpu_custom_call.1} parent=35 // pred_fallthru
          _
        // Predicated region
        $region101: #{tpu_custom_call.1} parent=35 // pred_check
          _
        $region102: #{tpu_custom_call.1} parent=35 // pred_check_branch
          %287 = sbr.rel (0) target = $region104
        $region103: #{tpu_custom_call.1} parent=35 // pred_region
          %s289 = ssub.s32 2, 1
          loop: start=0, step=1, limit=1
          $region105: #{tpu_custom_call.1} parent=103 // loop_pre_header
            _
          $region106: #{tpu_custom_call.1} parent=103 // loop_header
            %s291 = sphi 0, %s295
            %p292 = scmp.ge.s32.totalorder %s291, 1
            %s296 = sphi %s281, %s281
            %s297 = sphi %s282, %s282
          $region107: #{tpu_custom_call.1} parent=103 // loop_header_branch
            %294 = sbr.rel (%p292) target = $region111
          $region108: #{tpu_custom_call.1} parent=103 // loop_body
            %v298 = vld [vmem:[%s296] sm:%s289]
            %299 = vst [vmem:[%s297] sm:%s289] %v298
          $region109: #{tpu_custom_call.1} parent=103 // loop_footer
            %s295 = sadd.s32 1, %s291
          $region110: #{tpu_custom_call.1} parent=103 // loop_footer_branch
            %290 = sbr.rel target = $region106
          $region111: #{tpu_custom_call.1} parent=103 // loop_exit
            _
        $region104: #{tpu_custom_call.1} parent=35 // pred_fallthru
          _
        // Predicated region
        $region123: #{tpu_custom_call.1} parent=35 // pred_check
          _
        $region124: #{tpu_custom_call.1} parent=35 // pred_check_branch
          %316 = sbr.rel (0) target = $region126
        $region125: #{tpu_custom_call.1} parent=35 // pred_region
          %317 = vsyncadd %s283, 16
        $region126: #{tpu_custom_call.1} parent=35 // pred_fallthru
          _
        %s318 = sadd.s32 %s203, 3
        %s319 = sld [smem:[#allocation5 + %s318]]
        %s320 = scalar_lea.vmem %s2, %s319
        %s321 = scalar_lea.vmem [#allocation2], 3
        %s322 = scalar_lea.sflag [#allocation3], 3
        // Predicated region
        $region127: #{tpu_custom_call.1} parent=35 // pred_check
          _
        $region128: #{tpu_custom_call.1} parent=35 // pred_check_branch
          %324 = sbr.rel target = $region130
        $region129: #{tpu_custom_call.1} parent=35 // pred_region
          // Predicated region
          $region142: #{tpu_custom_call.1} parent=129 // pred_check
            _
          $region143: #{tpu_custom_call.1} parent=129 // pred_check_branch
            %340 = sbr.rel (0) target = $region145
          $region144: #{tpu_custom_call.1} parent=129 // pred_region
            %s342 = ssub.s32 2, 1
            loop: start=0, step=1, limit=1
            $region146: #{tpu_custom_call.1} parent=144 // loop_pre_header
              _
            $region147: #{tpu_custom_call.1} parent=144 // loop_header
              %s344 = sphi 0, %s348
              %p345 = scmp.ge.s32.totalorder %s344, 1
              %s349 = sphi %s320, %s320
              %s350 = sphi %s321, %s321
            $region148: #{tpu_custom_call.1} parent=144 // loop_header_branch
              %347 = sbr.rel (%p345) target = $region152
            $region149: #{tpu_custom_call.1} parent=144 // loop_body
              %v351 = vld [vmem:[%s349] sm:%s342]
              %352 = vst [vmem:[%s350] sm:%s342] %v351
            $region150: #{tpu_custom_call.1} parent=144 // loop_footer
              %s348 = sadd.s32 1, %s344
            $region151: #{tpu_custom_call.1} parent=144 // loop_footer_branch
              %343 = sbr.rel target = $region147
            $region152: #{tpu_custom_call.1} parent=144 // loop_exit
              _
          $region145: #{tpu_custom_call.1} parent=129 // pred_fallthru
            _
        $region130: #{tpu_custom_call.1} parent=35 // pred_fallthru
          _
        // Predicated region
        $region131: #{tpu_custom_call.1} parent=35 // pred_check
          _
        $region132: #{tpu_custom_call.1} parent=35 // pred_check_branch
          %326 = sbr.rel (0) target = $region134
        $region133: #{tpu_custom_call.1} parent=35 // pred_region
          %s328 = ssub.s32 2, 1
          loop: start=0, step=1, limit=1
          $region135: #{tpu_custom_call.1} parent=133 // loop_pre_header
            _
          $region136: #{tpu_custom_call.1} parent=133 // loop_header
            %s330 = sphi 0, %s334
            %p331 = scmp.ge.s32.totalorder %s330, 1
            %s335 = sphi %s320, %s320
            %s336 = sphi %s321, %s321
          $region137: #{tpu_custom_call.1} parent=133 // loop_header_branch
            %333 = sbr.rel (%p331) target = $region141
          $region138: #{tpu_custom_call.1} parent=133 // loop_body
            %v337 = vld [vmem:[%s335] sm:%s328]
            %338 = vst [vmem:[%s336] sm:%s328] %v337
          $region139: #{tpu_custom_call.1} parent=133 // loop_footer
            %s334 = sadd.s32 1, %s330
          $region140: #{tpu_custom_call.1} parent=133 // loop_footer_branch
            %329 = sbr.rel target = $region136
          $region141: #{tpu_custom_call.1} parent=133 // loop_exit
            _
        $region134: #{tpu_custom_call.1} parent=35 // pred_fallthru
          _
        // Predicated region
        $region153: #{tpu_custom_call.1} parent=35 // pred_check
          _
        $region154: #{tpu_custom_call.1} parent=35 // pred_check_branch
          %355 = sbr.rel (0) target = $region156
        $region155: #{tpu_custom_call.1} parent=35 // pred_region
          %356 = vsyncadd %s322, 16
        $region156: #{tpu_custom_call.1} parent=35 // pred_fallthru
          _
        %s357 = sadd.s32 %s203, 4
        %s358 = sld [smem:[#allocation5 + %s357]]
        %s359 = scalar_lea.vmem %s2, %s358
        %s360 = scalar_lea.vmem [#allocation2], 4
        %s361 = scalar_lea.sflag [#allocation3], 4
        // Predicated region
        $region157: #{tpu_custom_call.1} parent=35 // pred_check
          _
        $region158: #{tpu_custom_call.1} parent=35 // pred_check_branch
          %363 = sbr.rel target = $region160
        $region159: #{tpu_custom_call.1} parent=35 // pred_region
          // Predicated region
          $region172: #{tpu_custom_call.1} parent=159 // pred_check
            _
          $region173: #{tpu_custom_call.1} parent=159 // pred_check_branch
            %379 = sbr.rel (0) target = $region175
          $region174: #{tpu_custom_call.1} parent=159 // pred_region
            %s381 = ssub.s32 2, 1
            loop: start=0, step=1, limit=1
            $region176: #{tpu_custom_call.1} parent=174 // loop_pre_header
              _
            $region177: #{tpu_custom_call.1} parent=174 // loop_header
              %s383 = sphi 0, %s387
              %p384 = scmp.ge.s32.totalorder %s383, 1
              %s388 = sphi %s359, %s359
              %s389 = sphi %s360, %s360
            $region178: #{tpu_custom_call.1} parent=174 // loop_header_branch
              %386 = sbr.rel (%p384) target = $region182
            $region179: #{tpu_custom_call.1} parent=174 // loop_body
              %v390 = vld [vmem:[%s388] sm:%s381]
              %391 = vst [vmem:[%s389] sm:%s381] %v390
            $region180: #{tpu_custom_call.1} parent=174 // loop_footer
              %s387 = sadd.s32 1, %s383
            $region181: #{tpu_custom_call.1} parent=174 // loop_footer_branch
              %382 = sbr.rel target = $region177
            $region182: #{tpu_custom_call.1} parent=174 // loop_exit
              _
          $region175: #{tpu_custom_call.1} parent=159 // pred_fallthru
            _
        $region160: #{tpu_custom_call.1} parent=35 // pred_fallthru
          _
        // Predicated region
        $region161: #{tpu_custom_call.1} parent=35 // pred_check
          _
        $region162: #{tpu_custom_call.1} parent=35 // pred_check_branch
          %365 = sbr.rel (0) target = $region164
        $region163: #{tpu_custom_call.1} parent=35 // pred_region
          %s367 = ssub.s32 2, 1
          loop: start=0, step=1, limit=1
          $region165: #{tpu_custom_call.1} parent=163 // loop_pre_header
            _
          $region166: #{tpu_custom_call.1} parent=163 // loop_header
            %s369 = sphi 0, %s373
            %p370 = scmp.ge.s32.totalorder %s369, 1
            %s374 = sphi %s359, %s359
            %s375 = sphi %s360, %s360
          $region167: #{tpu_custom_call.1} parent=163 // loop_header_branch
            %372 = sbr.rel (%p370) target = $region171
          $region168: #{tpu_custom_call.1} parent=163 // loop_body
            %v376 = vld [vmem:[%s374] sm:%s367]
            %377 = vst [vmem:[%s375] sm:%s367] %v376
          $region169: #{tpu_custom_call.1} parent=163 // loop_footer
            %s373 = sadd.s32 1, %s369
          $region170: #{tpu_custom_call.1} parent=163 // loop_footer_branch
            %368 = sbr.rel target = $region166
          $region171: #{tpu_custom_call.1} parent=163 // loop_exit
            _
        $region164: #{tpu_custom_call.1} parent=35 // pred_fallthru
          _
        // Predicated region
        $region183: #{tpu_custom_call.1} parent=35 // pred_check
          _
        $region184: #{tpu_custom_call.1} parent=35 // pred_check_branch
          %394 = sbr.rel (0) target = $region186
        $region185: #{tpu_custom_call.1} parent=35 // pred_region
          %395 = vsyncadd %s361, 16
        $region186: #{tpu_custom_call.1} parent=35 // pred_fallthru
          _
        %s396 = sadd.s32 %s203, 5
        %s397 = sld [smem:[#allocation5 + %s396]]
        %s398 = scalar_lea.vmem %s2, %s397
        %s399 = scalar_lea.vmem [#allocation2], 5
        %s400 = scalar_lea.sflag [#allocation3], 5
        // Predicated region
        $region187: #{tpu_custom_call.1} parent=35 // pred_check
          _
        $region188: #{tpu_custom_call.1} parent=35 // pred_check_branch
          %402 = sbr.rel target = $region190
        $region189: #{tpu_custom_call.1} parent=35 // pred_region
          // Predicated region
          $region202: #{tpu_custom_call.1} parent=189 // pred_check
            _
          $region203: #{tpu_custom_call.1} parent=189 // pred_check_branch
            %418 = sbr.rel (0) target = $region205
          $region204: #{tpu_custom_call.1} parent=189 // pred_region
            %s420 = ssub.s32 2, 1
            loop: start=0, step=1, limit=1
            $region206: #{tpu_custom_call.1} parent=204 // loop_pre_header
              _
            $region207: #{tpu_custom_call.1} parent=204 // loop_header
              %s422 = sphi 0, %s426
              %p423 = scmp.ge.s32.totalorder %s422, 1
              %s427 = sphi %s398, %s398
              %s428 = sphi %s399, %s399
            $region208: #{tpu_custom_call.1} parent=204 // loop_header_branch
              %425 = sbr.rel (%p423) target = $region212
            $region209: #{tpu_custom_call.1} parent=204 // loop_body
              %v429 = vld [vmem:[%s427] sm:%s420]
              %430 = vst [vmem:[%s428] sm:%s420] %v429
            $region210: #{tpu_custom_call.1} parent=204 // loop_footer
              %s426 = sadd.s32 1, %s422
            $region211: #{tpu_custom_call.1} parent=204 // loop_footer_branch
              %421 = sbr.rel target = $region207
            $region212: #{tpu_custom_call.1} parent=204 // loop_exit
              _
          $region205: #{tpu_custom_call.1} parent=189 // pred_fallthru
            _
        $region190: #{tpu_custom_call.1} parent=35 // pred_fallthru
          _
        // Predicated region
        $region191: #{tpu_custom_call.1} parent=35 // pred_check
          _
        $region192: #{tpu_custom_call.1} parent=35 // pred_check_branch
          %404 = sbr.rel (0) target = $region194
        $region193: #{tpu_custom_call.1} parent=35 // pred_region
          %s406 = ssub.s32 2, 1
          loop: start=0, step=1, limit=1
          $region195: #{tpu_custom_call.1} parent=193 // loop_pre_header
            _
          $region196: #{tpu_custom_call.1} parent=193 // loop_header
            %s408 = sphi 0, %s412
            %p409 = scmp.ge.s32.totalorder %s408, 1
            %s413 = sphi %s398, %s398
            %s414 = sphi %s399, %s399
          $region197: #{tpu_custom_call.1} parent=193 // loop_header_branch
            %411 = sbr.rel (%p409) target = $region201
          $region198: #{tpu_custom_call.1} parent=193 // loop_body
            %v415 = vld [vmem:[%s413] sm:%s406]
            %416 = vst [vmem:[%s414] sm:%s406] %v415
          $region199: #{tpu_custom_call.1} parent=193 // loop_footer
            %s412 = sadd.s32 1, %s408
          $region200: #{tpu_custom_call.1} parent=193 // loop_footer_branch
            %407 = sbr.rel target = $region196
          $region201: #{tpu_custom_call.1} parent=193 // loop_exit
            _
        $region194: #{tpu_custom_call.1} parent=35 // pred_fallthru
          _
        // Predicated region
        $region213: #{tpu_custom_call.1} parent=35 // pred_check
          _
        $region214: #{tpu_custom_call.1} parent=35 // pred_check_branch
          %433 = sbr.rel (0) target = $region216
        $region215: #{tpu_custom_call.1} parent=35 // pred_region
          %434 = vsyncadd %s400, 16
        $region216: #{tpu_custom_call.1} parent=35 // pred_fallthru
          _
        %s435 = sadd.s32 %s203, 6
        %s436 = sld [smem:[#allocation5 + %s435]]
        %s437 = scalar_lea.vmem %s2, %s436
        %s438 = scalar_lea.vmem [#allocation2], 6
        %s439 = scalar_lea.sflag [#allocation3], 6
        // Predicated region
        $region217: #{tpu_custom_call.1} parent=35 // pred_check
          _
        $region218: #{tpu_custom_call.1} parent=35 // pred_check_branch
          %441 = sbr.rel target = $region220
        $region219: #{tpu_custom_call.1} parent=35 // pred_region
          // Predicated region
          $region232: #{tpu_custom_call.1} parent=219 // pred_check
            _
          $region233: #{tpu_custom_call.1} parent=219 // pred_check_branch
            %457 = sbr.rel (0) target = $region235
          $region234: #{tpu_custom_call.1} parent=219 // pred_region
            %s459 = ssub.s32 2, 1
            loop: start=0, step=1, limit=1
            $region236: #{tpu_custom_call.1} parent=234 // loop_pre_header
              _
            $region237: #{tpu_custom_call.1} parent=234 // loop_header
              %s461 = sphi 0, %s465
              %p462 = scmp.ge.s32.totalorder %s461, 1
              %s466 = sphi %s437, %s437
              %s467 = sphi %s438, %s438
            $region238: #{tpu_custom_call.1} parent=234 // loop_header_branch
              %464 = sbr.rel (%p462) target = $region242
            $region239: #{tpu_custom_call.1} parent=234 // loop_body
              %v468 = vld [vmem:[%s466] sm:%s459]
              %469 = vst [vmem:[%s467] sm:%s459] %v468
            $region240: #{tpu_custom_call.1} parent=234 // loop_footer
              %s465 = sadd.s32 1, %s461
            $region241: #{tpu_custom_call.1} parent=234 // loop_footer_branch
              %460 = sbr.rel target = $region237
            $region242: #{tpu_custom_call.1} parent=234 // loop_exit
              _
          $region235: #{tpu_custom_call.1} parent=219 // pred_fallthru
            _
        $region220: #{tpu_custom_call.1} parent=35 // pred_fallthru
          _
        // Predicated region
        $region221: #{tpu_custom_call.1} parent=35 // pred_check
          _
        $region222: #{tpu_custom_call.1} parent=35 // pred_check_branch
          %443 = sbr.rel (0) target = $region224
        $region223: #{tpu_custom_call.1} parent=35 // pred_region
          %s445 = ssub.s32 2, 1
          loop: start=0, step=1, limit=1
          $region225: #{tpu_custom_call.1} parent=223 // loop_pre_header
            _
          $region226: #{tpu_custom_call.1} parent=223 // loop_header
            %s447 = sphi 0, %s451
            %p448 = scmp.ge.s32.totalorder %s447, 1
            %s452 = sphi %s437, %s437
            %s453 = sphi %s438, %s438
          $region227: #{tpu_custom_call.1} parent=223 // loop_header_branch
            %450 = sbr.rel (%p448) target = $region231
          $region228: #{tpu_custom_call.1} parent=223 // loop_body
            %v454 = vld [vmem:[%s452] sm:%s445]
            %455 = vst [vmem:[%s453] sm:%s445] %v454
          $region229: #{tpu_custom_call.1} parent=223 // loop_footer
            %s451 = sadd.s32 1, %s447
          $region230: #{tpu_custom_call.1} parent=223 // loop_footer_branch
            %446 = sbr.rel target = $region226
          $region231: #{tpu_custom_call.1} parent=223 // loop_exit
            _
        $region224: #{tpu_custom_call.1} parent=35 // pred_fallthru
          _
        // Predicated region
        $region243: #{tpu_custom_call.1} parent=35 // pred_check
          _
        $region244: #{tpu_custom_call.1} parent=35 // pred_check_branch
          %472 = sbr.rel (0) target = $region246
        $region245: #{tpu_custom_call.1} parent=35 // pred_region
          %473 = vsyncadd %s439, 16
        $region246: #{tpu_custom_call.1} parent=35 // pred_fallthru
          _
        %s474 = sadd.s32 %s203, 7
        %s475 = sld [smem:[#allocation5 + %s474]]
        %s476 = scalar_lea.vmem %s2, %s475
        %s477 = scalar_lea.vmem [#allocation2], 7
        %s478 = scalar_lea.sflag [#allocation3], 7
        // Predicated region
        $region247: #{tpu_custom_call.1} parent=35 // pred_check
          _
        $region248: #{tpu_custom_call.1} parent=35 // pred_check_branch
          %480 = sbr.rel target = $region250
        $region249: #{tpu_custom_call.1} parent=35 // pred_region
          // Predicated region
          $region262: #{tpu_custom_call.1} parent=249 // pred_check
            _
          $region263: #{tpu_custom_call.1} parent=249 // pred_check_branch
            %496 = sbr.rel (0) target = $region265
          $region264: #{tpu_custom_call.1} parent=249 // pred_region
            %s498 = ssub.s32 2, 1
            loop: start=0, step=1, limit=1
            $region266: #{tpu_custom_call.1} parent=264 // loop_pre_header
              _
            $region267: #{tpu_custom_call.1} parent=264 // loop_header
              %s500 = sphi 0, %s504
              %p501 = scmp.ge.s32.totalorder %s500, 1
              %s505 = sphi %s476, %s476
              %s506 = sphi %s477, %s477
            $region268: #{tpu_custom_call.1} parent=264 // loop_header_branch
              %503 = sbr.rel (%p501) target = $region272
            $region269: #{tpu_custom_call.1} parent=264 // loop_body
              %v507 = vld [vmem:[%s505] sm:%s498]
              %508 = vst [vmem:[%s506] sm:%s498] %v507
            $region270: #{tpu_custom_call.1} parent=264 // loop_footer
              %s504 = sadd.s32 1, %s500
            $region271: #{tpu_custom_call.1} parent=264 // loop_footer_branch
              %499 = sbr.rel target = $region267
            $region272: #{tpu_custom_call.1} parent=264 // loop_exit
              _
          $region265: #{tpu_custom_call.1} parent=249 // pred_fallthru
            _
        $region250: #{tpu_custom_call.1} parent=35 // pred_fallthru
          _
        // Predicated region
        $region251: #{tpu_custom_call.1} parent=35 // pred_check
          _
        $region252: #{tpu_custom_call.1} parent=35 // pred_check_branch
          %482 = sbr.rel (0) target = $region254
        $region253: #{tpu_custom_call.1} parent=35 // pred_region
          %s484 = ssub.s32 2, 1
          loop: start=0, step=1, limit=1
          $region255: #{tpu_custom_call.1} parent=253 // loop_pre_header
            _
          $region256: #{tpu_custom_call.1} parent=253 // loop_header
            %s486 = sphi 0, %s490
            %p487 = scmp.ge.s32.totalorder %s486, 1
            %s491 = sphi %s476, %s476
            %s492 = sphi %s477, %s477
          $region257: #{tpu_custom_call.1} parent=253 // loop_header_branch
            %489 = sbr.rel (%p487) target = $region261
          $region258: #{tpu_custom_call.1} parent=253 // loop_body
            %v493 = vld [vmem:[%s491] sm:%s484]
            %494 = vst [vmem:[%s492] sm:%s484] %v493
          $region259: #{tpu_custom_call.1} parent=253 // loop_footer
            %s490 = sadd.s32 1, %s486
          $region260: #{tpu_custom_call.1} parent=253 // loop_footer_branch
            %485 = sbr.rel target = $region256
          $region261: #{tpu_custom_call.1} parent=253 // loop_exit
            _
        $region254: #{tpu_custom_call.1} parent=35 // pred_fallthru
          _
        // Predicated region
        $region273: #{tpu_custom_call.1} parent=35 // pred_check
          _
        $region274: #{tpu_custom_call.1} parent=35 // pred_check_branch
          %511 = sbr.rel (0) target = $region276
        $region275: #{tpu_custom_call.1} parent=35 // pred_region
          %512 = vsyncadd %s478, 16
        $region276: #{tpu_custom_call.1} parent=35 // pred_fallthru
          _
        %v513 = vld [vmem:[%s202] sm:$0xff]
        %v514 = vlaneseq
        %v515 = vand.u32 %v514, 127
        %v516 = vadd.s32 %v515, 128
        %517 = vset.pattern.permute.xlu0 0
        %518 = vperm.xlu0 %517, %v513
        %v519 = vpop.permute.xlu0 %518
        %vm520 = vcmp.eq.s32.totalorder %v515, %v519
        %vm521 = vcmp.eq.s32.totalorder %v516, %v519
        %v522 = vsel %vm520, 1, 0
        %v523 = vsel %vm521, 1, 0
        %v524 = vcvt.s32.f32 %v522
        %v525 = vcvt.s32.f32 %v523
        %v526 = vpack.c.bf16 %v525, %v524
        %v527 = vunpack.c.l.bf16 %v526
        %v528 = vunpack.c.h.bf16 %v526
        %v529 = vadd.f32 %v527, 0.0
        %v530 = vadd.f32 %v528, 0.0
        %v531 = vpack.c.bf16 %v530, %v529
        %532 = vset.pattern.permute.xlu0 1
        %533 = vperm.xlu0 %532, %v513
        %v534 = vpop.permute.xlu0 %533
        %vm535 = vcmp.eq.s32.totalorder %v515, %v534
        %vm536 = vcmp.eq.s32.totalorder %v516, %v534
        %v537 = vsel %vm535, 1, 0
        %v538 = vsel %vm536, 1, 0
        %v539 = vcvt.s32.f32 %v537
        %v540 = vcvt.s32.f32 %v538
        %v541 = vpack.c.bf16 %v540, %v539
        %v542 = vunpack.c.l.bf16 %v531
        %v543 = vunpack.c.h.bf16 %v531
        %v544 = vunpack.c.l.bf16 %v541
        %v545 = vunpack.c.h.bf16 %v541
        %v546 = vadd.f32 %v542, %v544
        %v547 = vadd.f32 %v543, %v545
        %v548 = vpack.c.bf16 %v547, %v546
        %549 = vset.pattern.permute.xlu0 2
        %550 = vperm.xlu0 %549, %v513
        %v551 = vpop.permute.xlu0 %550
        %vm552 = vcmp.eq.s32.totalorder %v515, %v551
        %vm553 = vcmp.eq.s32.totalorder %v516, %v551
        %v554 = vsel %vm552, 1, 0
        %v555 = vsel %vm553, 1, 0
        %v556 = vcvt.s32.f32 %v554
        %v557 = vcvt.s32.f32 %v555
        %v558 = vpack.c.bf16 %v557, %v556
        %v559 = vunpack.c.l.bf16 %v548
        %v560 = vunpack.c.h.bf16 %v548
        %v561 = vunpack.c.l.bf16 %v558
        %v562 = vunpack.c.h.bf16 %v558
        %v563 = vadd.f32 %v559, %v561
        %v564 = vadd.f32 %v560, %v562
        %v565 = vpack.c.bf16 %v564, %v563
        %566 = vset.pattern.permute.xlu0 3
        %567 = vperm.xlu0 %566, %v513
        %v568 = vpop.permute.xlu0 %567
        %vm569 = vcmp.eq.s32.totalorder %v515, %v568
        %vm570 = vcmp.eq.s32.totalorder %v516, %v568
        %v571 = vsel %vm569, 1, 0
        %v572 = vsel %vm570, 1, 0
        %v573 = vcvt.s32.f32 %v571
        %v574 = vcvt.s32.f32 %v572
        %v575 = vpack.c.bf16 %v574, %v573
        %v576 = vunpack.c.l.bf16 %v565
        %v577 = vunpack.c.h.bf16 %v565
        %v578 = vunpack.c.l.bf16 %v575
        %v579 = vunpack.c.h.bf16 %v575
        %v580 = vadd.f32 %v576, %v578
        %v581 = vadd.f32 %v577, %v579
        %v582 = vpack.c.bf16 %v581, %v580
        %583 = vset.pattern.permute.xlu0 4
        %584 = vperm.xlu0 %583, %v513
        %v585 = vpop.permute.xlu0 %584
        %vm586 = vcmp.eq.s32.totalorder %v515, %v585
        %vm587 = vcmp.eq.s32.totalorder %v516, %v585
        %v588 = vsel %vm586, 1, 0
        %v589 = vsel %vm587, 1, 0
        %v590 = vcvt.s32.f32 %v588
        %v591 = vcvt.s32.f32 %v589
        %v592 = vpack.c.bf16 %v591, %v590
        %v593 = vunpack.c.l.bf16 %v582
        %v594 = vunpack.c.h.bf16 %v582
        %v595 = vunpack.c.l.bf16 %v592
        %v596 = vunpack.c.h.bf16 %v592
        %v597 = vadd.f32 %v593, %v595
        %v598 = vadd.f32 %v594, %v596
        %v599 = vpack.c.bf16 %v597, %v597
        %v600 = vpack.c.bf16 %v598, %v598
        %v601 = vld [vmem:[%s3] sm:$0xf]
        %v602 = vld [vmem:[%s3 + $0x4] sm:$0xf]
        %v603 = vld [vmem:[%s3 + $0x8] sm:$0xf]
        %v604 = vld [vmem:[%s3 + $0xc] sm:$0xf]
        %v605 = vld [vmem:[%s3 + $0x10] sm:$0xf]
        %v606 = vld [vmem:[%s3 + $0x14] sm:$0xf]
        %v607 = vld [vmem:[%s3 + $0x18] sm:$0xf]
        %v608 = vld [vmem:[%s3 + $0x1c] sm:$0xf]
        %v609 = vld [vmem:[%s3 + $0x20] sm:$0xf]
        %v610 = vld [vmem:[%s3 + $0x24] sm:$0xf]
        %v611 = vld [vmem:[%s3 + $0x28] sm:$0xf]
        %v612 = vld [vmem:[%s3 + $0x2c] sm:$0xf]
        %v613 = vld [vmem:[%s3 + $0x30] sm:$0xf]
        %v614 = vld [vmem:[%s3 + $0x34] sm:$0xf]
        %v615 = vld [vmem:[%s3 + $0x38] sm:$0xf]
        %v616 = vld [vmem:[%s3 + $0x3c] sm:$0xf]
        %v617 = vld [vmem:[%s3 + $0x40] sm:$0xf]
        %v618 = vld [vmem:[%s3 + $0x44] sm:$0xf]
        %v619 = vld [vmem:[%s3 + $0x48] sm:$0xf]
        %v620 = vld [vmem:[%s3 + $0x4c] sm:$0xf]
        %v621 = vld [vmem:[%s3 + $0x50] sm:$0xf]
        %v622 = vld [vmem:[%s3 + $0x54] sm:$0xf]
        %v623 = vld [vmem:[%s3 + $0x58] sm:$0xf]
        %v624 = vld [vmem:[%s3 + $0x5c] sm:$0xf]
        %v625 = vld [vmem:[%s3 + $0x60] sm:$0xf]
        %v626 = vld [vmem:[%s3 + $0x64] sm:$0xf]
        %v627 = vld [vmem:[%s3 + $0x68] sm:$0xf]
        %v628 = vld [vmem:[%s3 + $0x6c] sm:$0xf]
        %v629 = vld [vmem:[%s3 + $0x70] sm:$0xf]
        %v630 = vld [vmem:[%s3 + $0x74] sm:$0xf]
        %v631 = vld [vmem:[%s3 + $0x78] sm:$0xf]
        %v632 = vld [vmem:[%s3 + $0x7c] sm:$0xf]
        %v665 = vunpack.c.l.b16 %v601
        %v666 = vunpack.c.l.b16 %v602
        %v667 = vunpack.c.l.b16 %v603
        %v668 = vunpack.c.l.b16 %v604
        %v669 = vunpack.c.l.b16 %v605
        %v670 = vunpack.c.l.b16 %v606
        %v671 = vunpack.c.l.b16 %v607
        %v672 = vunpack.c.l.b16 %v608
        %v673 = vunpack.c.l.b16 %v609
        %v674 = vunpack.c.l.b16 %v610
        %v675 = vunpack.c.l.b16 %v611
        %v676 = vunpack.c.l.b16 %v612
        %v677 = vunpack.c.l.b16 %v613
        %v678 = vunpack.c.l.b16 %v614
        %v679 = vunpack.c.l.b16 %v615
        %v680 = vunpack.c.l.b16 %v616
        %v681 = vunpack.c.l.b16 %v617
        %v682 = vunpack.c.l.b16 %v618
        %v683 = vunpack.c.l.b16 %v619
        %v684 = vunpack.c.l.b16 %v620
        %v685 = vunpack.c.l.b16 %v621
        %v686 = vunpack.c.l.b16 %v622
        %v687 = vunpack.c.l.b16 %v623
        %v688 = vunpack.c.l.b16 %v624
        %v689 = vunpack.c.l.b16 %v625
        %v690 = vunpack.c.l.b16 %v626
        %v691 = vunpack.c.l.b16 %v627
        %v692 = vunpack.c.l.b16 %v628
        %v693 = vunpack.c.l.b16 %v629
        %v694 = vunpack.c.l.b16 %v630
        %v695 = vunpack.c.l.b16 %v631
        %v696 = vunpack.c.l.b16 %v632
        %v697 = vpack.c.b16 %v666, %v665
        %v698 = vpack.c.b16 %v668, %v667
        %v699 = vpack.c.b16 %v670, %v669
        %v700 = vpack.c.b16 %v672, %v671
        %v701 = vpack.c.b16 %v674, %v673
        %v702 = vpack.c.b16 %v676, %v675
        %v703 = vpack.c.b16 %v678, %v677
        %v704 = vpack.c.b16 %v680, %v679
        %v705 = vpack.c.b16 %v682, %v681
        %v706 = vpack.c.b16 %v684, %v683
        %v707 = vpack.c.b16 %v686, %v685
        %v708 = vpack.c.b16 %v688, %v687
        %v709 = vpack.c.b16 %v690, %v689
        %v710 = vpack.c.b16 %v692, %v691
        %v711 = vpack.c.b16 %v694, %v693
        %v712 = vpack.c.b16 %v696, %v695
        %729 = vmatpush.bf16.msra.mxu0 %v704
        %730 = vmatpush.bf16.msra.mxu0 %v703
        %731 = vmatpush.bf16.msra.mxu0 %v702
        %732 = vmatpush.bf16.msra.mxu0 %v701
        %733 = vmatpush.bf16.msra.mxu0 %v700
        %734 = vmatpush.bf16.msra.mxu0 %v699
        %735 = vmatpush.bf16.msra.mxu0 %v698
        %736 = vmatpush.bf16.msra.mxu0 %v697
        %737 = vmatmul.bf16.gmra.mxu0 %v599
        %v738 = vpop.f32.mrf.mxu0
        %v739 = vadd.f32 0.0, %v738
        %v740 = vpop.f32.mrf.mxu0
        %741 = vdwg.mxu0
        %742 = vmatpush.bf16.msra.mxu0 %v712
        %743 = vmatpush.bf16.msra.mxu0 %v711
        %744 = vmatpush.bf16.msra.mxu0 %v710
        %745 = vmatpush.bf16.msra.mxu0 %v709
        %746 = vmatpush.bf16.msra.mxu0 %v708
        %747 = vmatpush.bf16.msra.mxu0 %v707
        %748 = vmatpush.bf16.msra.mxu0 %v706
        %749 = vmatpush.bf16.msra.mxu0 %v705
        %750 = vmatmul.bf16.gmra.mxu0 %v600
        %v751 = vpop.f32.mrf.mxu0
        %v752 = vadd.f32 %v739, %v751
        %v753 = vpop.f32.mrf.mxu0
        %754 = vdwg.mxu0
        loop: start=0, step=1, limit=8
        $region277: #{tpu_custom_call.1} parent=35 // loop_pre_header
          _
        $region278: #{tpu_custom_call.1} parent=35 // loop_header
          %s756 = sphi 0, %s760
          %p757 = scmp.ge.s32.totalorder %s756, 8
        $region279: #{tpu_custom_call.1} parent=35 // loop_header_branch
          %759 = sbr.rel (%p757) target = $region283
        $region280: #{tpu_custom_call.1} parent=35 // loop_body
          %p761 = scmp.lt.s32.totalorder %s756, 0
          %s762 = ssub.s32 0, %s756
          %s763 = scalar_select %p761, %s762, %s756
          %s764 = sand.u32 %s763, 7
          %s765 = ssub.s32 0, %s764
          %s766 = scalar_select %p761, %s765, %s764
          %p767 = scmp.ne.s32.totalorder %s766, 0
          %p768 = scmp.lt.s32.totalorder %s766, 0
          %p769 = pnand %p768, %p767
          %p770 = pneg %p769
          %s771 = sadd.s32 %s766, 8
          %s772 = scalar_select %p770, %s771, %s766
          %s773 = scalar_lea.sflag [#allocation3], %s772
          %s774 = smul.u32 1, 1
          %s775 = sshll.u32 %s774, 4
          %776 = dma.done %s773, %s775
          %s777 = sadd.s32 %s756, 8
          %p778 = scmp.lt.s32.totalorder %s777, 8
          // Predicated region
          $region284: #{tpu_custom_call.1} parent=280 // pred_check
            %p779 = pneg %p778
          $region285: #{tpu_custom_call.1} parent=280 // pred_check_branch
            %781 = sbr.rel (%p779) target = $region287
          $region286: #{tpu_custom_call.1} parent=280 // pred_region
            %s782 = sadd.s32 %s203, %s777
            %s783 = sld [smem:[#allocation5 + %s782]]
            %p784 = scmp.lt.s32.totalorder %s777, 0
            %s785 = ssub.s32 0, %s777
            %s786 = scalar_select %p784, %s785, %s777
            %s787 = sand.u32 %s786, 7
            %s788 = ssub.s32 0, %s787
            %s789 = scalar_select %p784, %s788, %s787
            %p790 = scmp.ne.s32.totalorder %s789, 0
            %p791 = scmp.lt.s32.totalorder %s789, 0
            %p792 = pnand %p791, %p790
            %p793 = pneg %p792
            %s794 = sadd.s32 %s789, 8
            %s795 = scalar_select %p793, %s794, %s789
            %s796 = scalar_lea.vmem %s2, %s783
            %s797 = scalar_lea.vmem [#allocation2], %s777
            %s798 = scalar_lea.sflag [#allocation3], %s795
            // Predicated region
            $region288: #{tpu_custom_call.1} parent=286 // pred_check
              _
            $region289: #{tpu_custom_call.1} parent=286 // pred_check_branch
              %800 = sbr.rel target = $region291
            $region290: #{tpu_custom_call.1} parent=286 // pred_region
              // Predicated region
              $region303: #{tpu_custom_call.1} parent=290 // pred_check
                _
              $region304: #{tpu_custom_call.1} parent=290 // pred_check_branch
                %816 = sbr.rel (0) target = $region306
              $region305: #{tpu_custom_call.1} parent=290 // pred_region
                %s818 = ssub.s32 2, 1
                loop: start=0, step=1, limit=1
                $region307: #{tpu_custom_call.1} parent=305 // loop_pre_header
                  _
                $region308: #{tpu_custom_call.1} parent=305 // loop_header
                  %s820 = sphi 0, %s824
                  %p821 = scmp.ge.s32.totalorder %s820, 1
                  %s825 = sphi %s796, %s796
                  %s826 = sphi %s797, %s797
                $region309: #{tpu_custom_call.1} parent=305 // loop_header_branch
                  %823 = sbr.rel (%p821) target = $region313
                $region310: #{tpu_custom_call.1} parent=305 // loop_body
                  %v827 = vld [vmem:[%s825] sm:%s818]
                  %828 = vst [vmem:[%s826] sm:%s818] %v827
                $region311: #{tpu_custom_call.1} parent=305 // loop_footer
                  %s824 = sadd.s32 1, %s820
                $region312: #{tpu_custom_call.1} parent=305 // loop_footer_branch
                  %819 = sbr.rel target = $region308
                $region313: #{tpu_custom_call.1} parent=305 // loop_exit
                  _
              $region306: #{tpu_custom_call.1} parent=290 // pred_fallthru
                _
            $region291: #{tpu_custom_call.1} parent=286 // pred_fallthru
              _
            // Predicated region
            $region292: #{tpu_custom_call.1} parent=286 // pred_check
              _
            $region293: #{tpu_custom_call.1} parent=286 // pred_check_branch
              %802 = sbr.rel (0) target = $region295
            $region294: #{tpu_custom_call.1} parent=286 // pred_region
              %s804 = ssub.s32 2, 1
              loop: start=0, step=1, limit=1
              $region296: #{tpu_custom_call.1} parent=294 // loop_pre_header
                _
              $region297: #{tpu_custom_call.1} parent=294 // loop_header
                %s806 = sphi 0, %s810
                %p807 = scmp.ge.s32.totalorder %s806, 1
                %s811 = sphi %s796, %s796
                %s812 = sphi %s797, %s797
              $region298: #{tpu_custom_call.1} parent=294 // loop_header_branch
                %809 = sbr.rel (%p807) target = $region302
              $region299: #{tpu_custom_call.1} parent=294 // loop_body
                %v813 = vld [vmem:[%s811] sm:%s804]
                %814 = vst [vmem:[%s812] sm:%s804] %v813
              $region300: #{tpu_custom_call.1} parent=294 // loop_footer
                %s810 = sadd.s32 1, %s806
              $region301: #{tpu_custom_call.1} parent=294 // loop_footer_branch
                %805 = sbr.rel target = $region297
              $region302: #{tpu_custom_call.1} parent=294 // loop_exit
                _
            $region295: #{tpu_custom_call.1} parent=286 // pred_fallthru
              _
            // Predicated region
            $region314: #{tpu_custom_call.1} parent=286 // pred_check
              _
            $region315: #{tpu_custom_call.1} parent=286 // pred_check_branch
              %831 = sbr.rel (0) target = $region317
            $region316: #{tpu_custom_call.1} parent=286 // pred_region
              %832 = vsyncadd %s798, 16
            $region317: #{tpu_custom_call.1} parent=286 // pred_fallthru
              _
          $region287: #{tpu_custom_call.1} parent=280 // pred_fallthru
            _
        $region281: #{tpu_custom_call.1} parent=35 // loop_footer
          %s760 = sadd.s32 1, %s756
        $region282: #{tpu_custom_call.1} parent=35 // loop_footer_branch
          %755 = sbr.rel target = $region278
        $region283: #{tpu_custom_call.1} parent=35 // loop_exit
          _
        %v833 = vld [vmem:[#allocation2] sm:$0xff]
        %v834 = vadd.f32 %v833, %v752
        %vm835 = vcmask 261120
        %v836 = vsel %vm835, %v834, 0.0
        %837 = vadd.xlane.f32.xlu0 %v836
        %v838 = vpop.xlane.xlu0 %837
        %v839 = vrcp.pop 32.0
        %v840 = vmul.f32 32.0, %v839
        %v841 = vsub.f32 1.0, %v840
        %v842 = vmul.f32 %v839, %v841
        %v843 = vadd.f32 %v839, %v842
        %vm844 = vweird.f32 %v839
        %v845 = vsel %vm844, %v839, %v843
        %v846 = vmul.f32 %v838, %v845
        %v847 = vsub.f32 %v834, %v846
        %v848 = vmul.f32 %v847, %v847
        %v849 = vsel %vm835, %v848, 0.0
        %850 = vadd.xlane.f32.xlu0 %v849
        %v851 = vpop.xlane.xlu0 %850
        %v852 = vmul.f32 %v851, %v845
        %v853 = vadd.f32 %v852, 1e-12
        %v854 = vrsqrt.pop %v853
        %v855 = vmul.f32 %v854, %v853
        %v856 = vmul.f32 %v855, %v854
        %v857 = vmul.f32 0.5, %v856
        %v858 = vsub.f32 1.5, %v857
        %v859 = vmul.f32 %v854, %v858
        %vm860 = vweird.f32 %v853
        %vm861 = vweird.f32 %v854
        %vm862 = vmor %vm860, %vm861
        %v863 = vsel %vm862, %v854, %v859
        %v864 = vmul.f32 %v847, %v863
        %v865 = vld [vmem:[%s4] sm:$0x1]
        %v867 = vperm.slane %v865, 0
        %v869 = vmul.f32 %v864, %v867
        %v870 = vld [vmem:[%s5] sm:$0x1]
        %v872 = vperm.slane %v870, 0
        %v874 = vadd.f32 %v869, %v872
        %875 = vst.msk [vmem:[%s198] sm:$0xff] %vm835, %v874
        %s876 = sand.u32 %s125, 1
        %s877 = scalar_lea.sflag [#allocation7], %s876
        %s878 = sand.u32 %s125, 1
        %s879 = smul.addr %s878, 8
        %s880 = scalar_lea.vmem [#allocation6], %s879
        // Predicated region
        $region318: #{tpu_custom_call.1} parent=35 // pred_check
          %p881 = pneg %p135
        $region319: #{tpu_custom_call.1} parent=35 // pred_check_branch
          %883 = sbr.rel (%p881) target = $region321
        $region320: #{tpu_custom_call.1} parent=35 // pred_region
          %885 = vsyncadd %s877, 0
          %s886 = smul.addr %s28, 8
          %s887 = scalar_lea.hbm %s6, %s886
          %s889 = sshll.u32 %s880, 4
          %s890 = int_to_ptr.vmem [resolvable:$true] %s889
          %s891 = sshll.u32 %s887, 4
          %s892 = int_to_ptr.hbm [resolvable:$true] %s891
          %894 = dma.vmem_to_hbm [thread:$0]  %s890, 128, %s892, %s877
        $region321: #{tpu_custom_call.1} parent=35 // pred_fallthru
          _
      $region36: #{tpu_custom_call.1} parent=5 // pred_fallthru
        _
      %p895 = scmp.le.s32.totalorder 2, %s23
      // Predicated region
      $region322: #{tpu_custom_call.1} parent=5 // pred_check
        %p896 = pneg %p895
      $region323: #{tpu_custom_call.1} parent=5 // pred_check_branch
        %898 = sbr.rel (%p896) target = $region325
      $region324: #{tpu_custom_call.1} parent=5 // pred_region
        %s899 = ssub.s32 %s23, 2
        // Predicated region
        $region326: #{tpu_custom_call.1} parent=324 // pred_check
          %p900 = pneg %p141
        $region327: #{tpu_custom_call.1} parent=324 // pred_check_branch
          %902 = sbr.rel (%p900) target = $region329
        $region328: #{tpu_custom_call.1} parent=324 // pred_region
          %s903 = sand.u32 %s126, 1
          %s904 = scalar_lea.sflag [#allocation7], %s903
          %s905 = sand.u32 %s126, 1
          %s906 = smul.addr %s905, 8
          %s907 = scalar_lea.vmem [#allocation6], %s906
          %909 = dma.done %s904, 128
        $region329: #{tpu_custom_call.1} parent=324 // pred_fallthru
          _
      $region325: #{tpu_custom_call.1} parent=5 // pred_fallthru
        _
    $region6: #{tpu_custom_call.1} parent=1 // loop_footer
      %s27 = sadd.s32 1, %s23
    $region7: #{tpu_custom_call.1} parent=1 // loop_footer_branch
      %22 = sbr.rel target = $region3
    $region8: #{tpu_custom_call.1} parent=1 // loop_exit
      _
    %910 = vsyncpa [#allocation7], 1
    %s911 = scalar_lea.sflag [#allocation7], 1
    %912 = vsyncpa %s911, 1
  %913 = vsyncmov [#allocation3]
  %s914 = vpop.sfrf %913
  %p915 = scmp.eq.s32.totalorder %s914, 0
  %p916 = pneg %p915
  %918 = shalt.err (%p916)
  %s919 = scalar_lea.sflag [#allocation3], 1
  %920 = vsyncmov %s919
  %s921 = vpop.sfrf %920
  %p922 = scmp.eq.s32.totalorder %s921, 0
  %p923 = pneg %p922
  %925 = shalt.err (%p923)
  %s926 = scalar_lea.sflag [#allocation3], 2
  %927 = vsyncmov %s926
  %s928 = vpop.sfrf %927
  %p929 = scmp.eq.s32.totalorder %s928, 0
  %p930 = pneg %p929
  %932 = shalt.err (%p930)
  %s933 = scalar_lea.sflag [#allocation3], 3
  %934 = vsyncmov %s933
  %s935 = vpop.sfrf %934
  %p936 = scmp.eq.s32.totalorder %s935, 0
  %p937 = pneg %p936
  %939 = shalt.err (%p937)
  %s940 = scalar_lea.sflag [#allocation3], 4
  %941 = vsyncmov %s940
  %s942 = vpop.sfrf %941
  %p943 = scmp.eq.s32.totalorder %s942, 0
  %p944 = pneg %p943
  %946 = shalt.err (%p944)
  %s947 = scalar_lea.sflag [#allocation3], 5
  %948 = vsyncmov %s947
  %s949 = vpop.sfrf %948
  %p950 = scmp.eq.s32.totalorder %s949, 0
  %p951 = pneg %p950
  %953 = shalt.err (%p951)
  %s954 = scalar_lea.sflag [#allocation3], 6
  %955 = vsyncmov %s954
  %s956 = vpop.sfrf %955
  %p957 = scmp.eq.s32.totalorder %s956, 0
  %p958 = pneg %p957
  %960 = shalt.err (%p958)
  %s961 = scalar_lea.sflag [#allocation3], 7
  %962 = vsyncmov %s961
  %s963 = vpop.sfrf %962
  %p964 = scmp.eq.s32.totalorder %s963, 0
  %p965 = pneg %p964
  %967 = shalt.err (%p965)

</llo_original>
